<compile_context>
chip_gen: v5e
topology: v5e:2x2
jax: 0.10.0
libtpu: 0.0.40
codegen_flags: <defaults>
</compile_context>

<pallas_src>
import jax
import jax.numpy as jnp
from jax.experimental import pallas as pl
from jax.experimental.pallas import tpu as pltpu

_NUM_CORES = 2  # leading core-parallel grid axis (v7x megacore; harmless elsewhere)


def _round_up(a, b):
    return ((a + b - 1) // b) * b


def _pick_tiles(n):
    # TN: node-row tile (MXU M dim), TC: contraction tile (A lane dim / A@P K
    # dim).  Multiples of 256 keep int8/bf16 blocks unmasked and the MXU fed;
    # in every tier _NUM_CORES * TN == TC so Np only needs rounding to TC.
    if n >= 16384:
        return 1024, 2048
    if n >= 2048:
        return 512, 1024
    return 256, 512


def _cmg_pool_kernel(a_ref, p_ref, x_ref, pt_ref, out_ref, acc_ref):
    i = pl.program_id(1)           # node-row tile within this core
    k = pl.program_id(2)           # contraction tile (innermost)

    # Per-core resident output accumulator (constant block index per core).
    @pl.when(jnp.logical_and(i == 0, k == 0))
    def _init_out():
        out_ref[...] = jnp.zeros_like(out_ref)

    # Per-row-tile A@P_aug accumulator.
    @pl.when(k == 0)
    def _init_acc():
        acc_ref[...] = jnp.zeros_like(acc_ref)

    # (TN, TC) 0/1 adjacency block: int8 in HBM -> bf16 for the MXU (exact).
    a = a_ref[...].astype(jnp.bfloat16)
    # acc += A_blk @ P_aug_blk.  Column K of P_aug is all-ones, so column K of
    # acc accumulates the node degrees in the same MXU pass.
    acc_ref[...] += jnp.dot(a, p_ref[...], preferred_element_type=jnp.float32)

    @pl.when(k == pl.num_programs(2) - 1)
    def _reduce():
        # One fused 256-lane-wide MXU pass per row tile:
        #   P_aug^T_blk @ [ x_blk | (A @ P_aug)_blk ]
        # Counts in acc are <= max node degree; exact in bf16 for degree <= 256.
        rhs = jnp.concatenate(
            [x_ref[...], acc_ref[...].astype(jnp.bfloat16)], axis=-1)
        out_ref[...] += jnp.dot(pt_ref[...], rhs,
                                preferred_element_type=jnp.float32)


def cmg_pooling_forward(x, edge_index, num_clusters, feature_pooling="sum"):
    """Single-graph CMGPooling forward.

    Args:
      x: (N, F) float32 node features.
      edge_index: (2, E) int COO edges.
      num_clusters: number of coarse nodes K.
      feature_pooling: 'sum' or 'mean'.
    Returns:
      (x_pool, edge_index_pool, batch_pool, L_pool)
    """
    if feature_pooling not in ("sum", "mean"):
        raise ValueError("feature_pooling must be 'sum' or 'mean'")

    N, F = x.shape
    K = int(num_clusters)
    NC = _NUM_CORES

    Kp = _round_up(K + 1, 128)          # +1: fused ones column for node degrees
    Fp = _round_up(F, 128)
    W = Fp + Kp                         # fused lane-dense output width

    TN, TC = _pick_tiles(N)
    Np = _round_up(N, TC)               # NC * TN == TC in every tier
    assert Np % (NC * TN) == 0 and Np % TC == 0
    R = Np // (NC * TN)                 # row tiles per core
    C = Np // TC                        # contraction tiles
    grid = (NC, R, C)

    # --- glue: dense adjacency scattered DIRECTLY into int8 (no f32 pass) ---
    # int8 is exact for 0/1 adjacency; multi-edges of multiplicity > 127 wrap.
    src = edge_index[0].astype(jnp.int32)
    dst = edge_index[1].astype(jnp.int32)
    A = jnp.zeros((Np, Np), jnp.int8).at[src, dst].add(jnp.int8(1))

    # --- glue: deterministic hard assignment (stand-in for CMG clustering) ---
    cluster = (jnp.arange(N) * K) // N
    P = jax.nn.one_hot(cluster, K, dtype=jnp.float32)               # (N, K)

    # Padded assignment (Np, Kp); column K is an all-ones "degree collector".
    P_aug = jnp.zeros((Np, Kp), jnp.float32)
    P_aug = P_aug.at[:N, :K].set(P)
    P_aug = P_aug.at[:, K].set(1.0)
    P_aug_bf = P_aug.astype(jnp.bfloat16)                           # 0/1 exact
    PT_aug_bf = P_aug_bf.T                                          # (Kp, Np)

    # Padded node features, stored bf16 to halve the feature HBM stream.
    x_pad = jnp.zeros((Np, Fp), jnp.bfloat16).at[:N, :F].set(
        x.astype(jnp.bfloat16))

    # Per-step VMEM working set (all tiers fit comfortably on every generation).
    ws = (2 * TN * TC                 # A blocks, int8, double-buffered
          + 2 * TC * Kp * 2           # P_aug blocks, bf16
          + 2 * TN * Fp * 2           # x blocks, bf16
          + 2 * Kp * TN * 2           # P_aug^T blocks, bf16
          + 2 * Kp * W * 4            # fused output block
          + TN * Kp * 4)              # f32 A@P scratch accumulator
    vmem_limit = int(min(48 * 1024 * 1024, max(32 * 1024 * 1024, 2 * ws)))

    cost = pl.CostEstimate(
        flops=2 * Np * Np * Kp + 2 * Np * Kp * W,
        transcendentals=0,
        bytes_accessed=(Np * Np                # A, int8
                        + 2 * 2 * Np * Kp      # P_aug + P_aug^T, bf16
                        + 2 * Np * Fp          # x, bf16
                        + 4 * NC * Kp * W),    # per-core fused outputs, f32
    )

    out = pl.pallas_call(
        _cmg_pool_kernel,
        out_shape=jax.ShapeDtypeStruct((NC, Kp, W), jnp.float32),
        grid=grid,
        in_specs=[
            # A row/contraction block, streamed int8.
            pl.BlockSpec((TN, TC), lambda c, i, k: (c * R + i, k)),
            # P_aug contraction block.
            pl.BlockSpec((TC, Kp), lambda c, i, k: (k, 0)),
            # x row block (re-DMA'd only when the row tile changes).
            pl.BlockSpec((TN, Fp), lambda c, i, k: (c * R + i, 0)),
            # Pre-transposed P_aug^T column block (natural MXU lhs orientation).
            pl.BlockSpec((Kp, TN), lambda c, i, k: (0, c * R + i)),
        ],
        out_specs=pl.BlockSpec((None, Kp, W), lambda c, i, k: (c, 0, 0)),
        scratch_shapes=[pltpu.VMEM((TN, Kp), jnp.float32)],
        compiler_params=pltpu.CompilerParams(
            dimension_semantics=("parallel", "arbitrary", "arbitrary"),
            vmem_limit_bytes=vmem_limit),
        cost_estimate=cost,
    )(A, P_aug_bf, x_pad, PT_aug_bf)

    fused = jnp.sum(out, axis=0)          # combine per-core partials (f32)

    x_pool = fused[:K, :F]                                  # P^T x
    M = fused[:K, Fp:Fp + K]                                # P^T A P
    pdeg = fused[:K, Fp + K]                                # P^T deg
    # Hard (one-hot) assignments => P^T D P is diagonal with entries P^T deg.
    L_pool = jnp.diag(pdeg) - M

    if feature_pooling == "mean":
        sizes = jnp.maximum(jnp.sum(P, axis=0), 1.0)        # cluster sizes
        x_pool = x_pool / sizes[:, None]

    # --- glue: coarse edge_index from coarse Laplacian (dynamic shape) ---
    rows, cols = jnp.nonzero(jnp.abs(L_pool) > 1e-9)
    edge_index_pool = jnp.stack([rows, cols]).astype(jnp.int32)
    batch_pool = jnp.zeros((K,), dtype=jnp.int32)

    return x_pool, edge_index_pool, batch_pool, L_pool


if __name__ == "__main__":
    key = jax.random.PRNGKey(0)

    N, F, K = 16, 32, 4  # small shapes: 16 nodes, 32-dim features, 4 clusters

    # Deterministic features
    x = jax.random.normal(key, (N, F), dtype=jnp.float32)

    # Deterministic undirected ring graph: edges (i, i+1) and (i+1, i)
    idx = jnp.arange(N, dtype=jnp.int32)
    nxt = (idx + 1) % N
    edge_index = jnp.stack([jnp.concatenate([idx, nxt]),
                            jnp.concatenate([nxt, idx])])            # (2, 2N)

    x_pool, edge_index_pool, batch_pool, L_pool = cmg_pooling_forward(
        x, edge_index, num_clusters=K, feature_pooling="sum")
    jax.block_until_ready(x_pool)
    jax.block_until_ready(L_pool)

    x_pool_mean, _, _, _ = cmg_pooling_forward(
        x, edge_index, num_clusters=K, feature_pooling="mean")
    jax.block_until_ready(x_pool_mean)

    # Pure-JAX reference (same math as the torch module; features compared at
    # bf16 precision since the kernel streams x in bf16, L_pool is exact).
    src, dst = edge_index[0], edge_index[1]
    A_ref = jnp.zeros((N, N), jnp.float32).at[src, dst].add(1.0)
    L_ref = jnp.diag(A_ref.sum(axis=1)) - A_ref
    cluster = (jnp.arange(N) * K) // N
    P_ref = jax.nn.one_hot(cluster, K, dtype=jnp.float32)
    x_bf = x.astype(jnp.bfloat16).astype(jnp.float32)
    xp_ref = P_ref.T @ x_bf
    lp_ref = P_ref.T @ L_ref @ P_ref
    sizes_ref = jnp.maximum(P_ref.sum(axis=0), 1.0)[:, None]

    assert jnp.allclose(x_pool, xp_ref, atol=1e-3), "x_pool (sum) mismatch"
    assert jnp.allclose(L_pool, lp_ref, atol=1e-4), "L_pool mismatch"
    assert jnp.allclose(x_pool_mean, xp_ref / sizes_ref, atol=1e-3), \
        "x_pool (mean) mismatch"

    print("KERNEL_OK")
</pallas_src>

<mosaic_0001>
module attributes {stable_mosaic.version = 11 : i64} {
  func.func @_cmg_pool_kernel(%arg0: i32, %arg1: i32, %arg2: i32, %arg3: memref<256x512xi8, #tpu.memory_space<vmem>>, %arg4: memref<512x128xbf16, #tpu.memory_space<vmem>>, %arg5: memref<256x128xbf16, #tpu.memory_space<vmem>>, %arg6: memref<128x256xbf16, #tpu.memory_space<vmem>>, %arg7: memref<1x128x256xf32, #tpu.memory_space<vmem>>, %arg8: memref<256x128xf32, #tpu.memory_space<vmem>>) attributes {dimension_semantics = [#tpu.dimension_semantics<parallel>, #tpu.dimension_semantics<arbitrary>, #tpu.dimension_semantics<arbitrary>], iteration_bounds = array<i64: 2, 1, 1>, scalar_prefetch = 0 : i64, scratch_operands = 1 : i64, tpu.core_type = #tpu.core_type<tc>, window_params = [{transform_indices = @transform_0, window_bounds = array<i64: 256, 512>}, {transform_indices = @transform_1, window_bounds = array<i64: 512, 128>}, {transform_indices = @transform_2, window_bounds = array<i64: 256, 128>}, {transform_indices = @transform_3, window_bounds = array<i64: 128, 256>}, {transform_indices = @transform_4, window_bounds = array<i64: 1, 128, 256>}]} {
    %c0_i32 = arith.constant 0 : i32
    %0 = arith.cmpi eq, %arg1, %c0_i32 : i32
    %c0_i32_0 = arith.constant 0 : i32
    %1 = arith.cmpi eq, %arg2, %c0_i32_0 : i32
    %2 = arith.andi %0, %1 : i1
    %3 = arith.extui %2 : i1 to i32
    %c0_i32_1 = arith.constant 0 : i32
    %4 = arith.cmpi ne, %3, %c0_i32_1 : i32
    scf.if %4 {
      %cst_13 = arith.constant 0.000000e+00 : f32
      %18 = vector.broadcast %cst_13 : f32 to vector<128x256xf32>
      %c0_14 = arith.constant 0 : index
      %c0_15 = arith.constant 0 : index
      %c0_16 = arith.constant 0 : index
      %19 = vector.load %arg7[%c0_14, %c0_15, %c0_16] : memref<1x128x256xf32, #tpu.memory_space<vmem>>, vector<1x128x256xf32>
      %20 = vector.shape_cast %19 : vector<1x128x256xf32> to vector<128x256xf32>
      %21 = vector.shape_cast %18 : vector<128x256xf32> to vector<1x128x256xf32>
      tpu.vector_store %arg7[%c0_14, %c0_15, %c0_16], %21 {strides = array<i32>} : memref<1x128x256xf32, #tpu.memory_space<vmem>>, vector<1x128x256xf32>,
    } else {
    }
    %c0_i32_2 = arith.constant 0 : i32
    %5 = arith.cmpi eq, %arg2, %c0_i32_2 : i32
    %6 = arith.extui %5 : i1 to i32
    %c0_i32_3 = arith.constant 0 : i32
    %7 = arith.cmpi ne, %6, %c0_i32_3 : i32
    scf.if %7 {
      %cst_13 = arith.constant 0.000000e+00 : f32
      %18 = vector.broadcast %cst_13 : f32 to vector<256x128xf32>
      %c0_14 = arith.constant 0 : index
      %c0_15 = arith.constant 0 : index
      %19 = vector.load %arg8[%c0_14, %c0_15] : memref<256x128xf32, #tpu.memory_space<vmem>>, vector<256x128xf32>
      tpu.vector_store %arg8[%c0_14, %c0_15], %18 {strides = array<i32>} : memref<256x128xf32, #tpu.memory_space<vmem>>, vector<256x128xf32>,
    } else {
    }
    %c0 = arith.constant 0 : index
    %c0_4 = arith.constant 0 : index
    %8 = vector.load %arg3[%c0, %c0_4] : memref<256x512xi8, #tpu.memory_space<vmem>>, vector<256x512xi8>
    %9 = arith.sitofp %8 : vector<256x512xi8> to vector<256x512xbf16>
    %c0_5 = arith.constant 0 : index
    %c0_6 = arith.constant 0 : index
    %10 = vector.load %arg8[%c0_5, %c0_6] : memref<256x128xf32, #tpu.memory_space<vmem>>, vector<256x128xf32>
    %c0_7 = arith.constant 0 : index
    %c0_8 = arith.constant 0 : index
    %11 = vector.load %arg4[%c0_7, %c0_8] : memref<512x128xbf16, #tpu.memory_space<vmem>>, vector<512x128xbf16>
    %cst = arith.constant dense<0.000000e+00> : vector<256x128xf32>
    %12 = tpu.matmul %9, %11, %cst {dimension_numbers = #tpu.dot_dimension_numbers<[1], [0], [0], [1], [0, 0, 1, 1], [], []>} : vector<256x512xbf16>, vector<512x128xbf16>, vector<256x128xf32> -> vector<256x128xf32>
    %13 = arith.addf %10, %12 : vector<256x128xf32>
    %c0_9 = arith.constant 0 : index
    %c0_10 = arith.constant 0 : index
    %14 = vector.load %arg8[%c0_9, %c0_10] : memref<256x128xf32, #tpu.memory_space<vmem>>, vector<256x128xf32>
    tpu.vector_store %arg8[%c0_9, %c0_10], %13 {strides = array<i32>} : memref<256x128xf32, #tpu.memory_space<vmem>>, vector<256x128xf32>,
    %c0_i32_11 = arith.constant 0 : i32
    %15 = arith.cmpi eq, %arg2, %c0_i32_11 : i32
    %16 = arith.extui %15 : i1 to i32
    %c0_i32_12 = arith.constant 0 : i32
    %17 = arith.cmpi ne, %16, %c0_i32_12 : i32
    scf.if %17 {
      %c0_13 = arith.constant 0 : index
      %c0_14 = arith.constant 0 : index
      %18 = vector.load %arg5[%c0_13, %c0_14] : memref<256x128xbf16, #tpu.memory_space<vmem>>, vector<256x128xbf16>
      %c0_15 = arith.constant 0 : index
      %c0_16 = arith.constant 0 : index
      %19 = vector.load %arg8[%c0_15, %c0_16] : memref<256x128xf32, #tpu.memory_space<vmem>>, vector<256x128xf32>
      %20 = arith.truncf %19 : vector<256x128xf32> to vector<256x128xbf16>
      %21 = tpu.concatenate %18, %20 in 1 : vector<256x128xbf16>, vector<256x128xbf16> -> vector<256x256xbf16>
      %c0_17 = arith.constant 0 : index
      %c0_18 = arith.constant 0 : index
      %c0_19 = arith.constant 0 : index
      %22 = vector.load %arg7[%c0_17, %c0_18, %c0_19] : memref<1x128x256xf32, #tpu.memory_space<vmem>>, vector<1x128x256xf32>
      %23 = vector.shape_cast %22 : vector<1x128x256xf32> to vector<128x256xf32>
      %c0_20 = arith.constant 0 : index
      %c0_21 = arith.constant 0 : index
      %24 = vector.load %arg6[%c0_20, %c0_21] : memref<128x256xbf16, #tpu.memory_space<vmem>>, vector<128x256xbf16>
      %cst_22 = arith.constant dense<0.000000e+00> : vector<128x256xf32>
      %25 = tpu.matmul %24, %21, %cst_22 {dimension_numbers = #tpu.dot_dimension_numbers<[1], [0], [0], [1], [0, 0, 1, 1], [], []>} : vector<128x256xbf16>, vector<256x256xbf16>, vector<128x256xf32> -> vector<128x256xf32>
      %26 = arith.addf %23, %25 : vector<128x256xf32>
      %c0_23 = arith.constant 0 : index
      %c0_24 = arith.constant 0 : index
      %c0_25 = arith.constant 0 : index
      %27 = vector.load %arg7[%c0_23, %c0_24, %c0_25] : memref<1x128x256xf32, #tpu.memory_space<vmem>>, vector<1x128x256xf32>
      %28 = vector.shape_cast %27 : vector<1x128x256xf32> to vector<128x256xf32>
      %29 = vector.shape_cast %26 : vector<128x256xf32> to vector<1x128x256xf32>
      tpu.vector_store %arg7[%c0_23, %c0_24, %c0_25], %29 {strides = array<i32>} : memref<1x128x256xf32, #tpu.memory_space<vmem>>, vector<1x128x256xf32>,
    } else {
    }
    return
  }
  func.func @transform_0(%arg0: i32, %arg1: i32, %arg2: i32) -> (i32, i32) {
    %c1_i32 = arith.constant 1 : i32
    %0 = arith.muli %arg0, %c1_i32 : i32
    %1 = arith.addi %0, %arg1 : i32
    %c0_i32 = arith.constant 0 : i32
    return %1, %arg2 : i32, i32
  }
  func.func @transform_1(%arg0: i32, %arg1: i32, %arg2: i32) -> (i32, i32) {
    %c0_i32 = arith.constant 0 : i32
    %c0_i32_0 = arith.constant 0 : i32
    return %arg2, %c0_i32 : i32, i32
  }
  func.func @transform_2(%arg0: i32, %arg1: i32, %arg2: i32) -> (i32, i32) {
    %c1_i32 = arith.constant 1 : i32
    %0 = arith.muli %arg0, %c1_i32 : i32
    %1 = arith.addi %0, %arg1 : i32
    %c0_i32 = arith.constant 0 : i32
    %c0_i32_0 = arith.constant 0 : i32
    return %1, %c0_i32 : i32, i32
  }
  func.func @transform_3(%arg0: i32, %arg1: i32, %arg2: i32) -> (i32, i32) {
    %c1_i32 = arith.constant 1 : i32
    %0 = arith.muli %arg0, %c1_i32 : i32
    %1 = arith.addi %0, %arg1 : i32
    %c0_i32 = arith.constant 0 : i32
    %c0_i32_0 = arith.constant 0 : i32
    return %c0_i32, %1 : i32, i32
  }
  func.func @transform_4(%arg0: i32, %arg1: i32, %arg2: i32) -> (i32, i32, i32) {
    %c0_i32 = arith.constant 0 : i32
    %c0_i32_0 = arith.constant 0 : i32
    %c0_i32_1 = arith.constant 0 : i32
    return %arg0, %c0_i32, %c0_i32_0 : i32, i32, i32
  }
}

</mosaic_0001>

<llo_original>
// kernel: tpu_custom_call.1
$region0: #{tpu_custom_call.1}
  #allocation0 [shape = 'u32[]', space=smem, size = 0x4, offset = 0x4, fixed_abs, tag = 'smem constant byte address 0x4 - core index']
  #allocation1 [shape = 'u32[72,128]{1,0:T(1,128)}', space=vmem, size = 0x9000, scoped, tag = 'internal scratch']
  #allocation2 [shape = 'f32[256,128]{1,0:T(8,128)}', space=vmem, size = 0x20000, scoped, tag = 'scratch operand']
  %s0 = inlined_call_operand.hbm [shape: s8[512,512], index: 0, kind: input, shape index: {}]
  %s1 = inlined_call_operand.hbm [shape: bf16[512,128], index: 1, kind: input, shape index: {}]
  %s2 = inlined_call_operand.hbm [shape: bf16[512,128], index: 2, kind: input, shape index: {}]
  %s3 = inlined_call_operand.hbm [shape: bf16[128,512], index: 3, kind: input, shape index: {}]
  %s4 = inlined_call_operand.hbm [shape: f32[2,128,256], index: 4, kind: output, shape index: {}]
  %s5 = sld [smem:[#allocation0]]
  $region77: #{tpu_custom_call.1} parent=0
    _
  %s7 = ssub.s32 1, %s5
  %s8 = scalar_select 0, %s7, %s5
  $region1: #{tpu_custom_call.1} parent=0
    #allocation3 [shape = 'u8[262144]{0}', space=vmem, size = 0x40000, scoped, tag = 'input window, operand 0']
    #allocation4 [shape = 's32[2]{0}', space=sflag, size = 0x8, scoped, tag = 'scoped memory for tpu_custom_call.1']
    #allocation5 [shape = 's32[2]{0}', space=sflag, size = 0x8, scoped, tag = 'scoped memory for tpu_custom_call.1']
    #allocation6 [shape = 'u8[131072]{0}', space=vmem, size = 0x20000, scoped, tag = 'input window, operand 1, single buffered']
    #allocation7 [shape = 's32[1]{0}', space=sflag, size = 0x4, scoped, tag = 'scoped memory for tpu_custom_call.1']
    #allocation8 [shape = 'u8[131072]{0}', space=vmem, size = 0x20000, scoped, tag = 'input window, operand 2']
    #allocation9 [shape = 'u8[131072]{0}', space=vmem, size = 0x20000, scoped, tag = 'input window, operand 3']
    #allocation10 [shape = 'u8[262144]{0}', space=vmem, size = 0x40000, scoped, tag = 'output window, operand 0']
    %9 = vsyncpa [#allocation4], 0
    %s10 = scalar_lea.sflag [#allocation4], 1
    %11 = vsyncpa %s10, 0
    %12 = vsyncpa [#allocation7], 0
    %13 = vsyncpa [#allocation5], 0
    %s14 = scalar_lea.sflag [#allocation5], 1
    %15 = vsyncpa %s14, 0
    loop: start=0, step=1, limit=4
    $region2: #{tpu_custom_call.1} parent=1 // loop_pre_header
      _
    $region3: #{tpu_custom_call.1} parent=1 // loop_header
      %s17 = sphi 0, %s21
      %p18 = scmp.ge.s32.totalorder %s17, 4
      %s24 = sphi 0, %s43
      %s25 = sphi 0, %s39
      %s26 = sphi 0, %s35
      %s27 = sphi 0, %s24
      %s28 = sphi 0, %s25
      %s29 = sphi 0, %s26
      %s30 = sphi 0, %s27
      %s31 = sphi 0, %s28
      %s32 = sphi 0, %s29
      %s50 = sphi 0, %s52
      %s53 = sphi 0, %s50
      %s54 = sphi 0, %s53
      %s70 = sphi 0, %s54
      %s76 = sphi 0, %s78
      %s79 = sphi 0, %s76
      %s80 = sphi 0, %s79
      %s96 = sphi 0, %s80
      %s104 = sphi 0, %s106
      %s107 = sphi 0, %s104
      %s108 = sphi 0, %s107
      %s124 = sphi 0, %s108
      %s132 = sphi 0, %s134
      %s135 = sphi 0, %s132
      %s136 = sphi 0, %s135
      %s152 = sphi 0, %s136
      %s158 = sphi 0, %s160
      %s161 = sphi 0, %s158
      %s162 = sphi 0, %s161
      %s178 = sphi 0, %s162
    $region4: #{tpu_custom_call.1} parent=1 // loop_header_branch
      %20 = sbr.rel (%p18) target = $region8
    $region5: #{tpu_custom_call.1} parent=1 // loop_body
      %s22 = ssub.s32 %s17, 1
      %s23 = ssub.s32 %s17, 2
      %s33 = sadd.s32 1, %s26
      %p34 = scmp.ge.s32.totalorder %s33, 1
      %s35 = scalar_select %p34, 0, %s33
      %s36 = sadd.s32 1, %s25
      %s37 = scalar_select %p34, %s36, %s25
      %p38 = scmp.ge.s32.totalorder %s37, 1
      %s39 = scalar_select %p38, 0, %s37
      %s40 = sadd.s32 1, %s24
      %s41 = scalar_select %p38, %s40, %s24
      %p42 = scmp.ge.s32.totalorder %s41, 2
      %s43 = scalar_select %p42, 0, %s41
      %s44 = sadd.s32 %s24, %s25
      %s45 = sadd.s32 %s43, %s39
      %s46 = ssub.s32 %s44, %s45
      %s47 = ssub.s32 %s26, %s35
      %s48 = sor.u32 %s46, %s47
      %p49 = scmp.eq.s32.totalorder %s48, 0
      %s51 = sadd.s32 %s50, 1
      %s52 = scalar_select %p49, %s50, %s51
      %p55 = pneg %p49
      %p56 = scmp.eq.s32.totalorder %s17, 1
      %p57 = por %p55, %p56
      %p58 = scmp.ne.s32.totalorder %s50, %s53
      %p59 = scmp.eq.s32.totalorder %s17, 0
      %p60 = por %p58, %p59
      %p61 = scmp.ne.s32.totalorder %s50, %s53
      %p62 = scmp.eq.s32.totalorder %s22, 1
      %p63 = por %p61, %p62
      %p64 = scmp.ne.s32.totalorder %s53, %s54
      %p65 = scmp.eq.s32.totalorder %s22, 0
      %p66 = por %p64, %p65
      %p67 = scmp.ne.s32.totalorder %s53, %s54
      %p68 = scmp.eq.s32.totalorder %s23, 1
      %p69 = por %p67, %p68
      %p71 = scmp.ne.s32.totalorder %s54, %s70
      %p72 = scmp.eq.s32.totalorder %s23, 0
      %p73 = por %p71, %p72
      %s74 = ssub.s32 %s26, %s35
      %p75 = scmp.eq.s32.totalorder %s74, 0
      %s77 = sadd.s32 %s76, 1
      %s78 = scalar_select %p75, %s76, %s77
      %p81 = pneg %p75
      %p82 = scmp.eq.s32.totalorder %s17, 1
      %p83 = por %p81, %p82
      %p84 = scmp.ne.s32.totalorder %s76, %s79
      %p85 = scmp.eq.s32.totalorder %s17, 0
      %p86 = por %p84, %p85
      %p87 = scmp.ne.s32.totalorder %s76, %s79
      %p88 = scmp.eq.s32.totalorder %s22, 1
      %p89 = por %p87, %p88
      %p90 = scmp.ne.s32.totalorder %s79, %s80
      %p91 = scmp.eq.s32.totalorder %s22, 0
      %p92 = por %p90, %p91
      %p93 = scmp.ne.s32.totalorder %s79, %s80
      %p94 = scmp.eq.s32.totalorder %s23, 1
      %p95 = por %p93, %p94
      %p97 = scmp.ne.s32.totalorder %s80, %s96
      %p98 = scmp.eq.s32.totalorder %s23, 0
      %p99 = por %p97, %p98
      %s100 = sadd.s32 %s24, %s25
      %s101 = sadd.s32 %s43, %s39
      %s102 = ssub.s32 %s100, %s101
      %p103 = scmp.eq.s32.totalorder %s102, 0
      %s105 = sadd.s32 %s104, 1
      %s106 = scalar_select %p103, %s104, %s105
      %p109 = pneg %p103
      %p110 = scmp.eq.s32.totalorder %s17, 1
      %p111 = por %p109, %p110
      %p112 = scmp.ne.s32.totalorder %s104, %s107
      %p113 = scmp.eq.s32.totalorder %s17, 0
      %p114 = por %p112, %p113
      %p115 = scmp.ne.s32.totalorder %s104, %s107
      %p116 = scmp.eq.s32.totalorder %s22, 1
      %p117 = por %p115, %p116
      %p118 = scmp.ne.s32.totalorder %s107, %s108
      %p119 = scmp.eq.s32.totalorder %s22, 0
      %p120 = por %p118, %p119
      %p121 = scmp.ne.s32.totalorder %s107, %s108
      %p122 = scmp.eq.s32.totalorder %s23, 1
      %p123 = por %p121, %p122
      %p125 = scmp.ne.s32.totalorder %s108, %s124
      %p126 = scmp.eq.s32.totalorder %s23, 0
      %p127 = por %p125, %p126
      %s128 = sadd.s32 %s24, %s25
      %s129 = sadd.s32 %s43, %s39
      %s130 = ssub.s32 %s128, %s129
      %p131 = scmp.eq.s32.totalorder %s130, 0
      %s133 = sadd.s32 %s132, 1
      %s134 = scalar_select %p131, %s132, %s133
      %p137 = pneg %p131
      %p138 = scmp.eq.s32.totalorder %s17, 1
      %p139 = por %p137, %p138
      %p140 = scmp.ne.s32.totalorder %s132, %s135
      %p141 = scmp.eq.s32.totalorder %s17, 0
      %p142 = por %p140, %p141
      %p143 = scmp.ne.s32.totalorder %s132, %s135
      %p144 = scmp.eq.s32.totalorder %s22, 1
      %p145 = por %p143, %p144
      %p146 = scmp.ne.s32.totalorder %s135, %s136
      %p147 = scmp.eq.s32.totalorder %s22, 0
      %p148 = por %p146, %p147
      %p149 = scmp.ne.s32.totalorder %s135, %s136
      %p150 = scmp.eq.s32.totalorder %s23, 1
      %p151 = por %p149, %p150
      %p153 = scmp.ne.s32.totalorder %s136, %s152
      %p154 = scmp.eq.s32.totalorder %s23, 0
      %p155 = por %p153, %p154
      %s156 = ssub.s32 %s24, %s43
      %p157 = scmp.eq.s32.totalorder %s156, 0
      %s159 = sadd.s32 %s158, 1
      %s160 = scalar_select %p157, %s158, %s159
      %p163 = pneg %p157
      %p164 = scmp.eq.s32.totalorder %s17, 1
      %p165 = por %p163, %p164
      %p166 = scmp.ne.s32.totalorder %s158, %s161
      %p167 = scmp.eq.s32.totalorder %s17, 0
      %p168 = por %p166, %p167
      %p169 = scmp.ne.s32.totalorder %s158, %s161
      %p170 = scmp.eq.s32.totalorder %s22, 1
      %p171 = por %p169, %p170
      %p172 = scmp.ne.s32.totalorder %s161, %s162
      %p173 = scmp.eq.s32.totalorder %s22, 0
      %p174 = por %p172, %p173
      %p175 = scmp.ne.s32.totalorder %s161, %s162
      %p176 = scmp.eq.s32.totalorder %s23, 1
      %p177 = por %p175, %p176
      %p179 = scmp.ne.s32.totalorder %s162, %s178
      %p180 = scmp.eq.s32.totalorder %s23, 0
      %p181 = por %p179, %p180
      %p182 = scmp.le.s32.totalorder 1, %s17
      %p183 = scmp.lt.s32.totalorder %s17, 3
      %p184 = pnand %p182, %p183
      %p185 = pneg %p184
      // Predicated region
      $region9: #{tpu_custom_call.1} parent=5 // pred_check
        _
      $region10: #{tpu_custom_call.1} parent=5 // pred_check_branch
        %187 = sbr.rel (%p184) target = $region12
      $region11: #{tpu_custom_call.1} parent=5 // pred_region
        %s188 = ssub.s32 %s17, 1
        // Predicated region
        $region13: #{tpu_custom_call.1} parent=11 // pred_check
          %p189 = pneg %p92
        $region14: #{tpu_custom_call.1} parent=11 // pred_check_branch
          %191 = sbr.rel (%p189) target = $region16
        $region15: #{tpu_custom_call.1} parent=11 // pred_region
          %s192 = smul.u32 64, %s29
          %194 = vsyncadd [#allocation7], 0
          %s195 = smul.addr %s192, 4
          %s196 = scalar_lea.hbm %s1, %s195
          %s197 = sshll.u32 %s196, 4
          %s198 = int_to_ptr.hbm [resolvable:$true] %s197
          %s199 = sshll.u32 [#allocation6], 4
          %s200 = int_to_ptr.vmem [resolvable:$true] %s199
          %205 = dma.hbm_to_vmem [thread:$0]  %s198, 4096, %s200, [#allocation7], 64, 64, 4
        $region16: #{tpu_custom_call.1} parent=11 // pred_fallthru
          _
      $region12: #{tpu_custom_call.1} parent=5 // pred_fallthru
        _
      %p206 = scmp.lt.s32.totalorder %s17, 2
      // Predicated region
      $region17: #{tpu_custom_call.1} parent=5 // pred_check
        %p207 = pneg %p206
      $region18: #{tpu_custom_call.1} parent=5 // pred_check_branch
        %209 = sbr.rel (%p207) target = $region20
      $region19: #{tpu_custom_call.1} parent=5 // pred_region
        // Predicated region
        $region21: #{tpu_custom_call.1} parent=19 // pred_check
          %p210 = pneg %p60
        $region22: #{tpu_custom_call.1} parent=19 // pred_check_branch
          %212 = sbr.rel (%p210) target = $region24
        $region23: #{tpu_custom_call.1} parent=19 // pred_region
          %s213 = sand.u32 %s17, 1
          %s214 = scalar_lea.sflag [#allocation4], %s213
          %s215 = sand.u32 %s50, 1
          %s216 = smul.addr %s215, 256
          %s217 = scalar_lea.vmem [#allocation3], %s216
          %s218 = sadd.s32 %s24, %s25
          %s219 = smul.u32 8, %s218
          %s220 = smul.u32 4, %s26
          %222 = vsyncadd %s214, 0
          %s223 = smul.addr %s219, 4
          %s224 = sadd.s32 %s220, %s223
          %s225 = smul.addr %s224, 8
          %s226 = scalar_lea.hbm %s0, %s225
          %s227 = sshll.u32 %s226, 4
          %s228 = int_to_ptr.hbm [resolvable:$true] %s227
          %s229 = sshll.u32 %s217, 4
          %s230 = int_to_ptr.vmem [resolvable:$true] %s229
          %235 = dma.hbm_to_vmem [thread:$0]  %s228, 4096, %s230, %s214, 512, 512, 32
        $region24: #{tpu_custom_call.1} parent=19 // pred_fallthru
          _
        // Predicated region
        $region25: #{tpu_custom_call.1} parent=19 // pred_check
          %p236 = pneg %p114
        $region26: #{tpu_custom_call.1} parent=19 // pred_check_branch
          %238 = sbr.rel (%p236) target = $region28
        $region27: #{tpu_custom_call.1} parent=19 // pred_region
          %s239 = sand.u32 %s17, 1
          %s240 = scalar_lea.sflag [#allocation4], %s239
          %s241 = sand.u32 %s104, 1
          %s242 = smul.addr %s241, 128
          %s243 = scalar_lea.vmem [#allocation8], %s242
          %s244 = sadd.s32 %s24, %s25
          %s245 = smul.u32 32, %s244
          %247 = vsyncadd %s240, 0
          %s248 = smul.addr %s245, 4
          %s249 = scalar_lea.hbm %s2, %s248
          %s250 = sshll.u32 %s249, 4
          %s251 = int_to_ptr.hbm [resolvable:$true] %s250
          %s252 = sshll.u32 %s243, 4
          %s253 = int_to_ptr.vmem [resolvable:$true] %s252
          %258 = dma.hbm_to_vmem [thread:$0]  %s251, 2048, %s253, %s240, 64, 64, 4
        $region28: #{tpu_custom_call.1} parent=19 // pred_fallthru
          _
        // Predicated region
        $region29: #{tpu_custom_call.1} parent=19 // pred_check
          %p259 = pneg %p142
        $region30: #{tpu_custom_call.1} parent=19 // pred_check_branch
          %261 = sbr.rel (%p259) target = $region32
        $region31: #{tpu_custom_call.1} parent=19 // pred_region
          %s262 = sand.u32 %s17, 1
          %s263 = scalar_lea.sflag [#allocation4], %s262
          %s264 = sand.u32 %s132, 1
          %s265 = smul.addr %s264, 128
          %s266 = scalar_lea.vmem [#allocation9], %s265
          %s267 = sadd.s32 %s24, %s25
          %s268 = smul.u32 2, %s267
          %270 = vsyncadd %s263, 0
          %s271 = smul.addr %s268, 4
          %s272 = scalar_lea.hbm %s3, %s271
          %s273 = sshll.u32 %s272, 4
          %s274 = int_to_ptr.hbm [resolvable:$true] %s273
          %s275 = sshll.u32 %s266, 4
          %s276 = int_to_ptr.vmem [resolvable:$true] %s275
          %281 = dma.hbm_to_vmem [thread:$0]  %s274, 2048, %s276, %s263, 256, 128, 8
        $region32: #{tpu_custom_call.1} parent=19 // pred_fallthru
          _
      $region20: #{tpu_custom_call.1} parent=5 // pred_fallthru
        _
      %p282 = scmp.le.s32.totalorder 1, %s17
      %p283 = scmp.lt.s32.totalorder %s17, 3
      %p284 = pnand %p282, %p283
      %p285 = pneg %p284
      // Predicated region
      $region33: #{tpu_custom_call.1} parent=5 // pred_check
        _
      $region34: #{tpu_custom_call.1} parent=5 // pred_check_branch
        %287 = sbr.rel (%p284) target = $region36
      $region35: #{tpu_custom_call.1} parent=5 // pred_region
        %s288 = ssub.s32 %s17, 1
        %s289 = sand.u32 %s22, 1
        %s290 = scalar_lea.sflag [#allocation4], %s289
        %s291 = sand.u32 %s53, 1
        %s292 = smul.addr %s291, 256
        %s293 = scalar_lea.vmem [#allocation3], %s292
        // Predicated region
        $region37: #{tpu_custom_call.1} parent=35 // pred_check
          %p294 = pneg %p66
        $region38: #{tpu_custom_call.1} parent=35 // pred_check_branch
          %296 = sbr.rel (%p294) target = $region40
        $region39: #{tpu_custom_call.1} parent=35 // pred_region
          %298 = dma.done %s290, 4096
        $region40: #{tpu_custom_call.1} parent=35 // pred_fallthru
          _
        // Predicated region
        $region41: #{tpu_custom_call.1} parent=35 // pred_check
          %p299 = pneg %p92
        $region42: #{tpu_custom_call.1} parent=35 // pred_check_branch
          %301 = sbr.rel (%p299) target = $region44
        $region43: #{tpu_custom_call.1} parent=35 // pred_region
          %303 = dma.done [#allocation7], 4096
        $region44: #{tpu_custom_call.1} parent=35 // pred_fallthru
          _
        %s304 = sand.u32 %s22, 1
        %s305 = scalar_lea.sflag [#allocation4], %s304
        %s306 = sand.u32 %s107, 1
        %s307 = smul.addr %s306, 128
        %s308 = scalar_lea.vmem [#allocation8], %s307
        // Predicated region
        $region45: #{tpu_custom_call.1} parent=35 // pred_check
          %p309 = pneg %p120
        $region46: #{tpu_custom_call.1} parent=35 // pred_check_branch
          %311 = sbr.rel (%p309) target = $region48
        $region47: #{tpu_custom_call.1} parent=35 // pred_region
          %313 = dma.done %s305, 2048
        $region48: #{tpu_custom_call.1} parent=35 // pred_fallthru
          _
        %s314 = sand.u32 %s22, 1
        %s315 = scalar_lea.sflag [#allocation4], %s314
        %s316 = sand.u32 %s135, 1
        %s317 = smul.addr %s316, 128
        %s318 = scalar_lea.vmem [#allocation9], %s317
        // Predicated region
        $region49: #{tpu_custom_call.1} parent=35 // pred_check
          %p319 = pneg %p148
        $region50: #{tpu_custom_call.1} parent=35 // pred_check_branch
          %321 = sbr.rel (%p319) target = $region52
        $region51: #{tpu_custom_call.1} parent=35 // pred_region
          %323 = dma.done %s315, 2048
        $region52: #{tpu_custom_call.1} parent=35 // pred_fallthru
          _
        %s324 = sand.u32 %s22, 1
        %s325 = scalar_lea.sflag [#allocation4], %s324
        %s326 = sand.u32 %s53, 1
        %s327 = smul.addr %s326, 256
        %s328 = scalar_lea.vmem [#allocation3], %s327
        %p329 = pneg %p66
        %p330 = pneg %p63
        %p331 = pneg %p92
        %p332 = pneg %p89
        %s333 = sand.u32 %s22, 1
        %s334 = scalar_lea.sflag [#allocation4], %s333
        %s335 = sand.u32 %s107, 1
        %s336 = smul.addr %s335, 128
        %s337 = scalar_lea.vmem [#allocation8], %s336
        %p338 = pneg %p120
        %p339 = pneg %p117
        %s340 = sand.u32 %s22, 1
        %s341 = scalar_lea.sflag [#allocation4], %s340
        %s342 = sand.u32 %s135, 1
        %s343 = smul.addr %s342, 128
        %s344 = scalar_lea.vmem [#allocation9], %s343
        %p345 = pneg %p148
        %p346 = pneg %p145
        %p347 = pneg %p174
        %p348 = pneg %p171
        %s349 = sand.u32 %s161, 1
        %s350 = scalar_lea.sflag [#allocation5], %s349
        %s351 = sand.u32 %s161, 1
        %s352 = smul.addr %s351, 256
        %s353 = scalar_lea.vmem [#allocation10], %s352
        %s354 = sadd.s32 %s27, %s28
        %s355 = smul.u32 8, %s354
        %s356 = smul.u32 4, %s29
        %s357 = smul.u32 64, %s29
        %s358 = sadd.s32 %s27, %s28
        %s359 = smul.u32 32, %s358
        %s360 = sadd.s32 %s27, %s28
        %s361 = smul.u32 2, %s360
        %p362 = scmp.eq.s32.totalorder %s28, 0
        %p363 = scmp.eq.s32.totalorder %s29, 0
        %p364 = pnand %p362, %p363
        %p365 = pneg %p364
        // Predicated region
        $region53: #{tpu_custom_call.1} parent=35 // pred_check
          _
        $region54: #{tpu_custom_call.1} parent=35 // pred_check_branch
          %367 = sbr.rel (%p364) target = $region56
        $region55: #{tpu_custom_call.1} parent=35 // pred_region
          %368 = vst [vmem:[%s353] sm:$0xff] 0.0
          %369 = vst [vmem:[%s353 + $0x8] sm:$0xff] 0.0
          %370 = vst [vmem:[%s353 + $0x10] sm:$0xff] 0.0
          %371 = vst [vmem:[%s353 + $0x18] sm:$0xff] 0.0
          %372 = vst [vmem:[%s353 + $0x20] sm:$0xff] 0.0
          %373 = vst [vmem:[%s353 + $0x28] sm:$0xff] 0.0
          %374 = vst [vmem:[%s353 + $0x30] sm:$0xff] 0.0
          %375 = vst [vmem:[%s353 + $0x38] sm:$0xff] 0.0
          %376 = vst [vmem:[%s353 + $0x40] sm:$0xff] 0.0
          %377 = vst [vmem:[%s353 + $0x48] sm:$0xff] 0.0
          %378 = vst [vmem:[%s353 + $0x50] sm:$0xff] 0.0
          %379 = vst [vmem:[%s353 + $0x58] sm:$0xff] 0.0
          %380 = vst [vmem:[%s353 + $0x60] sm:$0xff] 0.0
          %381 = vst [vmem:[%s353 + $0x68] sm:$0xff] 0.0
          %382 = vst [vmem:[%s353 + $0x70] sm:$0xff] 0.0
          %383 = vst [vmem:[%s353 + $0x78] sm:$0xff] 0.0
          %384 = vst [vmem:[%s353 + $0x80] sm:$0xff] 0.0
          %385 = vst [vmem:[%s353 + $0x88] sm:$0xff] 0.0
          %386 = vst [vmem:[%s353 + $0x90] sm:$0xff] 0.0
          %387 = vst [vmem:[%s353 + $0x98] sm:$0xff] 0.0
          %388 = vst [vmem:[%s353 + $0xa0] sm:$0xff] 0.0
          %389 = vst [vmem:[%s353 + $0xa8] sm:$0xff] 0.0
          %390 = vst [vmem:[%s353 + $0xb0] sm:$0xff] 0.0
          %391 = vst [vmem:[%s353 + $0xb8] sm:$0xff] 0.0
          %392 = vst [vmem:[%s353 + $0xc0] sm:$0xff] 0.0
          %393 = vst [vmem:[%s353 + $0xc8] sm:$0xff] 0.0
          %394 = vst [vmem:[%s353 + $0xd0] sm:$0xff] 0.0
          %395 = vst [vmem:[%s353 + $0xd8] sm:$0xff] 0.0
          %396 = vst [vmem:[%s353 + $0xe0] sm:$0xff] 0.0
          %397 = vst [vmem:[%s353 + $0xe8] sm:$0xff] 0.0
          %398 = vst [vmem:[%s353 + $0xf0] sm:$0xff] 0.0
          %399 = vst [vmem:[%s353 + $0xf8] sm:$0xff] 0.0
        $region56: #{tpu_custom_call.1} parent=35 // pred_fallthru
          _
        // Predicated region
        $region57: #{tpu_custom_call.1} parent=35 // pred_check
          %p400 = pneg %p363
        $region58: #{tpu_custom_call.1} parent=35 // pred_check_branch
          %402 = sbr.rel (%p400) target = $region60
        $region59: #{tpu_custom_call.1} parent=35 // pred_region
          %403 = vst [vmem:[#allocation2] sm:$0xff] 0.0
          %404 = vst [vmem:[#allocation2 + $0x8] sm:$0xff] 0.0
          %405 = vst [vmem:[#allocation2 + $0x10] sm:$0xff] 0.0
          %406 = vst [vmem:[#allocation2 + $0x18] sm:$0xff] 0.0
          %407 = vst [vmem:[#allocation2 + $0x20] sm:$0xff] 0.0
          %408 = vst [vmem:[#allocation2 + $0x28] sm:$0xff] 0.0
          %409 = vst [vmem:[#allocation2 + $0x30] sm:$0xff] 0.0
          %410 = vst [vmem:[#allocation2 + $0x38] sm:$0xff] 0.0
          %411 = vst [vmem:[#allocation2 + $0x40] sm:$0xff] 0.0
          %412 = vst [vmem:[#allocation2 + $0x48] sm:$0xff] 0.0
          %413 = vst [vmem:[#allocation2 + $0x50] sm:$0xff] 0.0
          %414 = vst [vmem:[#allocation2 + $0x58] sm:$0xff] 0.0
          %415 = vst [vmem:[#allocation2 + $0x60] sm:$0xff] 0.0
          %416 = vst [vmem:[#allocation2 + $0x68] sm:$0xff] 0.0
          %417 = vst [vmem:[#allocation2 + $0x70] sm:$0xff] 0.0
          %418 = vst [vmem:[#allocation2 + $0x78] sm:$0xff] 0.0
          %419 = vst [vmem:[#allocation2 + $0x80] sm:$0xff] 0.0
          %420 = vst [vmem:[#allocation2 + $0x88] sm:$0xff] 0.0
          %421 = vst [vmem:[#allocation2 + $0x90] sm:$0xff] 0.0
          %422 = vst [vmem:[#allocation2 + $0x98] sm:$0xff] 0.0
          %423 = vst [vmem:[#allocation2 + $0xa0] sm:$0xff] 0.0
          %424 = vst [vmem:[#allocation2 + $0xa8] sm:$0xff] 0.0
          %425 = vst [vmem:[#allocation2 + $0xb0] sm:$0xff] 0.0
          %426 = vst [vmem:[#allocation2 + $0xb8] sm:$0xff] 0.0
          %427 = vst [vmem:[#allocation2 + $0xc0] sm:$0xff] 0.0
          %428 = vst [vmem:[#allocation2 + $0xc8] sm:$0xff] 0.0
          %429 = vst [vmem:[#allocation2 + $0xd0] sm:$0xff] 0.0
          %430 = vst [vmem:[#allocation2 + $0xd8] sm:$0xff] 0.0
          %431 = vst [vmem:[#allocation2 + $0xe0] sm:$0xff] 0.0
          %432 = vst [vmem:[#allocation2 + $0xe8] sm:$0xff] 0.0
          %433 = vst [vmem:[#allocation2 + $0xf0] sm:$0xff] 0.0
          %434 = vst [vmem:[#allocation2 + $0xf8] sm:$0xff] 0.0
        $region60: #{tpu_custom_call.1} parent=35 // pred_fallthru
          _
        %v435 = vld [vmem:[%s293] sm:$0xff]
        %v436 = vld [vmem:[%s293 + $0x8] sm:$0xff]
        %v437 = vld [vmem:[%s293 + $0x10] sm:$0xff]
        %v438 = vld [vmem:[%s293 + $0x18] sm:$0xff]
        %v439 = vld [vmem:[%s293 + $0x20] sm:$0xff]
        %v440 = vld [vmem:[%s293 + $0x28] sm:$0xff]
        %v441 = vld [vmem:[%s293 + $0x30] sm:$0xff]
        %v442 = vld [vmem:[%s293 + $0x38] sm:$0xff]
        %v443 = vld [vmem:[%s293 + $0x40] sm:$0xff]
        %v444 = vld [vmem:[%s293 + $0x48] sm:$0xff]
        %v445 = vld [vmem:[%s293 + $0x50] sm:$0xff]
        %v446 = vld [vmem:[%s293 + $0x58] sm:$0xff]
        %v447 = vld [vmem:[%s293 + $0x60] sm:$0xff]
        %v448 = vld [vmem:[%s293 + $0x68] sm:$0xff]
        %v449 = vld [vmem:[%s293 + $0x70] sm:$0xff]
        %v450 = vld [vmem:[%s293 + $0x78] sm:$0xff]
        %v451 = vld [vmem:[%s293 + $0x80] sm:$0xff]
        %v452 = vld [vmem:[%s293 + $0x88] sm:$0xff]
        %v453 = vld [vmem:[%s293 + $0x90] sm:$0xff]
        %v454 = vld [vmem:[%s293 + $0x98] sm:$0xff]
        %v455 = vld [vmem:[%s293 + $0xa0] sm:$0xff]
        %v456 = vld [vmem:[%s293 + $0xa8] sm:$0xff]
        %v457 = vld [vmem:[%s293 + $0xb0] sm:$0xff]
        %v458 = vld [vmem:[%s293 + $0xb8] sm:$0xff]
        %v459 = vld [vmem:[%s293 + $0xc0] sm:$0xff]
        %v460 = vld [vmem:[%s293 + $0xc8] sm:$0xff]
        %v461 = vld [vmem:[%s293 + $0xd0] sm:$0xff]
        %v462 = vld [vmem:[%s293 + $0xd8] sm:$0xff]
        %v463 = vld [vmem:[%s293 + $0xe0] sm:$0xff]
        %v464 = vld [vmem:[%s293 + $0xe8] sm:$0xff]
        %v465 = vld [vmem:[%s293 + $0xf0] sm:$0xff]
        %v466 = vld [vmem:[%s293 + $0xf8] sm:$0xff]
        %v467 = vunpack.c.0.s8 %v435
        %v468 = vunpack.c.0.s8 %v436
        %v469 = vunpack.c.0.s8 %v437
        %v470 = vunpack.c.0.s8 %v438
        %v471 = vunpack.c.1.s8 %v435
        %v472 = vunpack.c.1.s8 %v436
        %v473 = vunpack.c.1.s8 %v437
        %v474 = vunpack.c.1.s8 %v438
        %v475 = vunpack.c.2.s8 %v435
        %v476 = vunpack.c.2.s8 %v436
        %v477 = vunpack.c.2.s8 %v437
        %v478 = vunpack.c.2.s8 %v438
        %v479 = vunpack.c.3.s8 %v435
        %v480 = vunpack.c.3.s8 %v436
        %v481 = vunpack.c.3.s8 %v437
        %v482 = vunpack.c.3.s8 %v438
        %v483 = vunpack.c.0.s8 %v439
        %v484 = vunpack.c.0.s8 %v440
        %v485 = vunpack.c.0.s8 %v441
        %v486 = vunpack.c.0.s8 %v442
        %v487 = vunpack.c.1.s8 %v439
        %v488 = vunpack.c.1.s8 %v440
        %v489 = vunpack.c.1.s8 %v441
        %v490 = vunpack.c.1.s8 %v442
        %v491 = vunpack.c.2.s8 %v439
        %v492 = vunpack.c.2.s8 %v440
        %v493 = vunpack.c.2.s8 %v441
        %v494 = vunpack.c.2.s8 %v442
        %v495 = vunpack.c.3.s8 %v439
        %v496 = vunpack.c.3.s8 %v440
        %v497 = vunpack.c.3.s8 %v441
        %v498 = vunpack.c.3.s8 %v442
        %v499 = vunpack.c.0.s8 %v443
        %v500 = vunpack.c.0.s8 %v444
        %v501 = vunpack.c.0.s8 %v445
        %v502 = vunpack.c.0.s8 %v446
        %v503 = vunpack.c.1.s8 %v443
        %v504 = vunpack.c.1.s8 %v444
        %v505 = vunpack.c.1.s8 %v445
        %v506 = vunpack.c.1.s8 %v446
        %v507 = vunpack.c.2.s8 %v443
        %v508 = vunpack.c.2.s8 %v444
        %v509 = vunpack.c.2.s8 %v445
        %v510 = vunpack.c.2.s8 %v446
        %v511 = vunpack.c.3.s8 %v443
        %v512 = vunpack.c.3.s8 %v444
        %v513 = vunpack.c.3.s8 %v445
        %v514 = vunpack.c.3.s8 %v446
        %v515 = vunpack.c.0.s8 %v447
        %v516 = vunpack.c.0.s8 %v448
        %v517 = vunpack.c.0.s8 %v449
        %v518 = vunpack.c.0.s8 %v450
        %v519 = vunpack.c.1.s8 %v447
        %v520 = vunpack.c.1.s8 %v448
        %v521 = vunpack.c.1.s8 %v449
        %v522 = vunpack.c.1.s8 %v450
        %v523 = vunpack.c.2.s8 %v447
        %v524 = vunpack.c.2.s8 %v448
        %v525 = vunpack.c.2.s8 %v449
        %v526 = vunpack.c.2.s8 %v450
        %v527 = vunpack.c.3.s8 %v447
        %v528 = vunpack.c.3.s8 %v448
        %v529 = vunpack.c.3.s8 %v449
        %v530 = vunpack.c.3.s8 %v450
        %v531 = vunpack.c.0.s8 %v451
        %v532 = vunpack.c.0.s8 %v452
        %v533 = vunpack.c.0.s8 %v453
        %v534 = vunpack.c.0.s8 %v454
        %v535 = vunpack.c.1.s8 %v451
        %v536 = vunpack.c.1.s8 %v452
        %v537 = vunpack.c.1.s8 %v453
        %v538 = vunpack.c.1.s8 %v454
        %v539 = vunpack.c.2.s8 %v451
        %v540 = vunpack.c.2.s8 %v452
        %v541 = vunpack.c.2.s8 %v453
        %v542 = vunpack.c.2.s8 %v454
        %v543 = vunpack.c.3.s8 %v451
        %v544 = vunpack.c.3.s8 %v452
        %v545 = vunpack.c.3.s8 %v453
        %v546 = vunpack.c.3.s8 %v454
        %v547 = vunpack.c.0.s8 %v455
        %v548 = vunpack.c.0.s8 %v456
        %v549 = vunpack.c.0.s8 %v457
        %v550 = vunpack.c.0.s8 %v458
        %v551 = vunpack.c.1.s8 %v455
        %v552 = vunpack.c.1.s8 %v456
        %v553 = vunpack.c.1.s8 %v457
        %v554 = vunpack.c.1.s8 %v458
        %v555 = vunpack.c.2.s8 %v455
        %v556 = vunpack.c.2.s8 %v456
        %v557 = vunpack.c.2.s8 %v457
        %v558 = vunpack.c.2.s8 %v458
        %v559 = vunpack.c.3.s8 %v455
        %v560 = vunpack.c.3.s8 %v456
        %v561 = vunpack.c.3.s8 %v457
        %v562 = vunpack.c.3.s8 %v458
        %v563 = vunpack.c.0.s8 %v459
        %v564 = vunpack.c.0.s8 %v460
        %v565 = vunpack.c.0.s8 %v461
        %v566 = vunpack.c.0.s8 %v462
        %v567 = vunpack.c.1.s8 %v459
        %v568 = vunpack.c.1.s8 %v460
        %v569 = vunpack.c.1.s8 %v461
        %v570 = vunpack.c.1.s8 %v462
        %v571 = vunpack.c.2.s8 %v459
        %v572 = vunpack.c.2.s8 %v460
        %v573 = vunpack.c.2.s8 %v461
        %v574 = vunpack.c.2.s8 %v462
        %v575 = vunpack.c.3.s8 %v459
        %v576 = vunpack.c.3.s8 %v460
        %v577 = vunpack.c.3.s8 %v461
        %v578 = vunpack.c.3.s8 %v462
        %v579 = vunpack.c.0.s8 %v463
        %v580 = vunpack.c.0.s8 %v464
        %v581 = vunpack.c.0.s8 %v465
        %v582 = vunpack.c.0.s8 %v466
        %v583 = vunpack.c.1.s8 %v463
        %v584 = vunpack.c.1.s8 %v464
        %v585 = vunpack.c.1.s8 %v465
        %v586 = vunpack.c.1.s8 %v466
        %v587 = vunpack.c.2.s8 %v463
        %v588 = vunpack.c.2.s8 %v464
        %v589 = vunpack.c.2.s8 %v465
        %v590 = vunpack.c.2.s8 %v466
        %v591 = vunpack.c.3.s8 %v463
        %v592 = vunpack.c.3.s8 %v464
        %v593 = vunpack.c.3.s8 %v465
        %v594 = vunpack.c.3.s8 %v466
        %v595 = vcvt.s32.f32 %v467
        %v596 = vcvt.s32.f32 %v468
        %v597 = vcvt.s32.f32 %v469
        %v598 = vcvt.s32.f32 %v470
        %v599 = vcvt.s32.f32 %v471
        %v600 = vcvt.s32.f32 %v472
        %v601 = vcvt.s32.f32 %v473
        %v602 = vcvt.s32.f32 %v474
        %v603 = vcvt.s32.f32 %v475
        %v604 = vcvt.s32.f32 %v476
        %v605 = vcvt.s32.f32 %v477
        %v606 = vcvt.s32.f32 %v478
        %v607 = vcvt.s32.f32 %v479
        %v608 = vcvt.s32.f32 %v480
        %v609 = vcvt.s32.f32 %v481
        %v610 = vcvt.s32.f32 %v482
        %v611 = vcvt.s32.f32 %v483
        %v612 = vcvt.s32.f32 %v484
        %v613 = vcvt.s32.f32 %v485
        %v614 = vcvt.s32.f32 %v486
        %v615 = vcvt.s32.f32 %v487
        %v616 = vcvt.s32.f32 %v488
        %v617 = vcvt.s32.f32 %v489
        %v618 = vcvt.s32.f32 %v490
        %v619 = vcvt.s32.f32 %v491
        %v620 = vcvt.s32.f32 %v492
        %v621 = vcvt.s32.f32 %v493
        %v622 = vcvt.s32.f32 %v494
        %v623 = vcvt.s32.f32 %v495
        %v624 = vcvt.s32.f32 %v496
        %v625 = vcvt.s32.f32 %v497
        %v626 = vcvt.s32.f32 %v498
        %v627 = vcvt.s32.f32 %v499
        %v628 = vcvt.s32.f32 %v500
        %v629 = vcvt.s32.f32 %v501
        %v630 = vcvt.s32.f32 %v502
        %v631 = vcvt.s32.f32 %v503
        %v632 = vcvt.s32.f32 %v504
        %v633 = vcvt.s32.f32 %v505
        %v634 = vcvt.s32.f32 %v506
        %v635 = vcvt.s32.f32 %v507
        %v636 = vcvt.s32.f32 %v508
        %v637 = vcvt.s32.f32 %v509
        %v638 = vcvt.s32.f32 %v510
        %v639 = vcvt.s32.f32 %v511
        %v640 = vcvt.s32.f32 %v512
        %v641 = vcvt.s32.f32 %v513
        %v642 = vcvt.s32.f32 %v514
        %v643 = vcvt.s32.f32 %v515
        %v644 = vcvt.s32.f32 %v516
        %v645 = vcvt.s32.f32 %v517
        %v646 = vcvt.s32.f32 %v518
        %v647 = vcvt.s32.f32 %v519
        %v648 = vcvt.s32.f32 %v520
        %v649 = vcvt.s32.f32 %v521
        %v650 = vcvt.s32.f32 %v522
        %v651 = vcvt.s32.f32 %v523
        %v652 = vcvt.s32.f32 %v524
        %v653 = vcvt.s32.f32 %v525
        %v654 = vcvt.s32.f32 %v526
        %v655 = vcvt.s32.f32 %v527
        %v656 = vcvt.s32.f32 %v528
        %v657 = vcvt.s32.f32 %v529
        %v658 = vcvt.s32.f32 %v530
        %v659 = vcvt.s32.f32 %v531
        %v660 = vcvt.s32.f32 %v532
        %v661 = vcvt.s32.f32 %v533
        %v662 = vcvt.s32.f32 %v534
        %v663 = vcvt.s32.f32 %v535
        %v664 = vcvt.s32.f32 %v536
        %v665 = vcvt.s32.f32 %v537
        %v666 = vcvt.s32.f32 %v538
        %v667 = vcvt.s32.f32 %v539
        %v668 = vcvt.s32.f32 %v540
        %v669 = vcvt.s32.f32 %v541
        %v670 = vcvt.s32.f32 %v542
        %v671 = vcvt.s32.f32 %v543
        %v672 = vcvt.s32.f32 %v544
        %v673 = vcvt.s32.f32 %v545
        %v674 = vcvt.s32.f32 %v546
        %v675 = vcvt.s32.f32 %v547
        %v676 = vcvt.s32.f32 %v548
        %v677 = vcvt.s32.f32 %v549
        %v678 = vcvt.s32.f32 %v550
        %v679 = vcvt.s32.f32 %v551
        %v680 = vcvt.s32.f32 %v552
        %v681 = vcvt.s32.f32 %v553
        %v682 = vcvt.s32.f32 %v554
        %v683 = vcvt.s32.f32 %v555
        %v684 = vcvt.s32.f32 %v556
        %v685 = vcvt.s32.f32 %v557
        %v686 = vcvt.s32.f32 %v558
        %v687 = vcvt.s32.f32 %v559
        %v688 = vcvt.s32.f32 %v560
        %v689 = vcvt.s32.f32 %v561
        %v690 = vcvt.s32.f32 %v562
        %v691 = vcvt.s32.f32 %v563
        %v692 = vcvt.s32.f32 %v564
        %v693 = vcvt.s32.f32 %v565
        %v694 = vcvt.s32.f32 %v566
        %v695 = vcvt.s32.f32 %v567
        %v696 = vcvt.s32.f32 %v568
        %v697 = vcvt.s32.f32 %v569
        %v698 = vcvt.s32.f32 %v570
        %v699 = vcvt.s32.f32 %v571
        %v700 = vcvt.s32.f32 %v572
        %v701 = vcvt.s32.f32 %v573
        %v702 = vcvt.s32.f32 %v574
        %v703 = vcvt.s32.f32 %v575
        %v704 = vcvt.s32.f32 %v576
        %v705 = vcvt.s32.f32 %v577
        %v706 = vcvt.s32.f32 %v578
        %v707 = vcvt.s32.f32 %v579
        %v708 = vcvt.s32.f32 %v580
        %v709 = vcvt.s32.f32 %v581
        %v710 = vcvt.s32.f32 %v582
        %v711 = vcvt.s32.f32 %v583
        %v712 = vcvt.s32.f32 %v584
        %v713 = vcvt.s32.f32 %v585
        %v714 = vcvt.s32.f32 %v586
        %v715 = vcvt.s32.f32 %v587
        %v716 = vcvt.s32.f32 %v588
        %v717 = vcvt.s32.f32 %v589
        %v718 = vcvt.s32.f32 %v590
        %v719 = vcvt.s32.f32 %v591
        %v720 = vcvt.s32.f32 %v592
        %v721 = vcvt.s32.f32 %v593
        %v722 = vcvt.s32.f32 %v594
        %v723 = vpack.c.bf16 %v599, %v595
        %v724 = vpack.c.bf16 %v600, %v596
        %v725 = vpack.c.bf16 %v601, %v597
        %v726 = vpack.c.bf16 %v602, %v598
        %v727 = vpack.c.bf16 %v607, %v603
        %v728 = vpack.c.bf16 %v608, %v604
        %v729 = vpack.c.bf16 %v609, %v605
        %v730 = vpack.c.bf16 %v610, %v606
        %v731 = vpack.c.bf16 %v615, %v611
        %v732 = vpack.c.bf16 %v616, %v612
        %v733 = vpack.c.bf16 %v617, %v613
        %v734 = vpack.c.bf16 %v618, %v614
        %v735 = vpack.c.bf16 %v623, %v619
        %v736 = vpack.c.bf16 %v624, %v620
        %v737 = vpack.c.bf16 %v625, %v621
        %v738 = vpack.c.bf16 %v626, %v622
        %v739 = vpack.c.bf16 %v631, %v627
        %v740 = vpack.c.bf16 %v632, %v628
        %v741 = vpack.c.bf16 %v633, %v629
        %v742 = vpack.c.bf16 %v634, %v630
        %v743 = vpack.c.bf16 %v639, %v635
        %v744 = vpack.c.bf16 %v640, %v636
        %v745 = vpack.c.bf16 %v641, %v637
        %v746 = vpack.c.bf16 %v642, %v638
        %v747 = vpack.c.bf16 %v647, %v643
        %v748 = vpack.c.bf16 %v648, %v644
        %v749 = vpack.c.bf16 %v649, %v645
        %v750 = vpack.c.bf16 %v650, %v646
        %v751 = vpack.c.bf16 %v655, %v651
        %v752 = vpack.c.bf16 %v656, %v652
        %v753 = vpack.c.bf16 %v657, %v653
        %v754 = vpack.c.bf16 %v658, %v654
        %v755 = vpack.c.bf16 %v663, %v659
        %v756 = vpack.c.bf16 %v664, %v660
        %v757 = vpack.c.bf16 %v665, %v661
        %v758 = vpack.c.bf16 %v666, %v662
        %v759 = vpack.c.bf16 %v671, %v667
        %v760 = vpack.c.bf16 %v672, %v668
        %v761 = vpack.c.bf16 %v673, %v669
        %v762 = vpack.c.bf16 %v674, %v670
        %v763 = vpack.c.bf16 %v679, %v675
        %v764 = vpack.c.bf16 %v680, %v676
        %v765 = vpack.c.bf16 %v681, %v677
        %v766 = vpack.c.bf16 %v682, %v678
        %v767 = vpack.c.bf16 %v687, %v683
        %v768 = vpack.c.bf16 %v688, %v684
        %v769 = vpack.c.bf16 %v689, %v685
        %v770 = vpack.c.bf16 %v690, %v686
        %v771 = vpack.c.bf16 %v695, %v691
        %v772 = vpack.c.bf16 %v696, %v692
        %v773 = vpack.c.bf16 %v697, %v693
        %v774 = vpack.c.bf16 %v698, %v694
        %v775 = vpack.c.bf16 %v703, %v699
        %v776 = vpack.c.bf16 %v704, %v700
        %v777 = vpack.c.bf16 %v705, %v701
        %v778 = vpack.c.bf16 %v706, %v702
        %v779 = vpack.c.bf16 %v711, %v707
        %v780 = vpack.c.bf16 %v712, %v708
        %v781 = vpack.c.bf16 %v713, %v709
        %v782 = vpack.c.bf16 %v714, %v710
        %v783 = vpack.c.bf16 %v719, %v715
        %v784 = vpack.c.bf16 %v720, %v716
        %v785 = vpack.c.bf16 %v721, %v717
        %v786 = vpack.c.bf16 %v722, %v718
        %v787 = vld [vmem:[#allocation2] sm:$0xff]
        %v788 = vld [vmem:[#allocation2 + $0x8] sm:$0xff]
        %v789 = vld [vmem:[#allocation2 + $0x10] sm:$0xff]
        %v790 = vld [vmem:[#allocation2 + $0x18] sm:$0xff]
        %v791 = vld [vmem:[#allocation2 + $0x20] sm:$0xff]
        %v792 = vld [vmem:[#allocation2 + $0x28] sm:$0xff]
        %v793 = vld [vmem:[#allocation2 + $0x30] sm:$0xff]
        %v794 = vld [vmem:[#allocation2 + $0x38] sm:$0xff]
        %v795 = vld [vmem:[#allocation2 + $0x40] sm:$0xff]
        %v796 = vld [vmem:[#allocation2 + $0x48] sm:$0xff]
        %v797 = vld [vmem:[#allocation2 + $0x50] sm:$0xff]
        %v798 = vld [vmem:[#allocation2 + $0x58] sm:$0xff]
        %v799 = vld [vmem:[#allocation2 + $0x60] sm:$0xff]
        %v800 = vld [vmem:[#allocation2 + $0x68] sm:$0xff]
        %v801 = vld [vmem:[#allocation2 + $0x70] sm:$0xff]
        %v802 = vld [vmem:[#allocation2 + $0x78] sm:$0xff]
        %v803 = vld [vmem:[#allocation2 + $0x80] sm:$0xff]
        %v804 = vld [vmem:[#allocation2 + $0x88] sm:$0xff]
        %v805 = vld [vmem:[#allocation2 + $0x90] sm:$0xff]
        %v806 = vld [vmem:[#allocation2 + $0x98] sm:$0xff]
        %v807 = vld [vmem:[#allocation2 + $0xa0] sm:$0xff]
        %v808 = vld [vmem:[#allocation2 + $0xa8] sm:$0xff]
        %v809 = vld [vmem:[#allocation2 + $0xb0] sm:$0xff]
        %v810 = vld [vmem:[#allocation2 + $0xb8] sm:$0xff]
        %v811 = vld [vmem:[#allocation2 + $0xc0] sm:$0xff]
        %v812 = vld [vmem:[#allocation2 + $0xc8] sm:$0xff]
        %v813 = vld [vmem:[#allocation2 + $0xd0] sm:$0xff]
        %v814 = vld [vmem:[#allocation2 + $0xd8] sm:$0xff]
        %v815 = vld [vmem:[#allocation2 + $0xe0] sm:$0xff]
        %v816 = vld [vmem:[#allocation2 + $0xe8] sm:$0xff]
        %v817 = vld [vmem:[#allocation2 + $0xf0] sm:$0xff]
        %v818 = vld [vmem:[#allocation2 + $0xf8] sm:$0xff]
        %v819 = vld [vmem:[#allocation6] sm:$0xf]
        %v820 = vld [vmem:[#allocation6 + $0x4] sm:$0xf]
        %v821 = vld [vmem:[#allocation6 + $0x8] sm:$0xf]
        %v822 = vld [vmem:[#allocation6 + $0xc] sm:$0xf]
        %v823 = vld [vmem:[#allocation6 + $0x10] sm:$0xf]
        %v824 = vld [vmem:[#allocation6 + $0x14] sm:$0xf]
        %v825 = vld [vmem:[#allocation6 + $0x18] sm:$0xf]
        %v826 = vld [vmem:[#allocation6 + $0x1c] sm:$0xf]
        %v827 = vld [vmem:[#allocation6 + $0x20] sm:$0xf]
        %v828 = vld [vmem:[#allocation6 + $0x24] sm:$0xf]
        %v829 = vld [vmem:[#allocation6 + $0x28] sm:$0xf]
        %v830 = vld [vmem:[#allocation6 + $0x2c] sm:$0xf]
        %v831 = vld [vmem:[#allocation6 + $0x30] sm:$0xf]
        %v832 = vld [vmem:[#allocation6 + $0x34] sm:$0xf]
        %v833 = vld [vmem:[#allocation6 + $0x38] sm:$0xf]
        %v834 = vld [vmem:[#allocation6 + $0x3c] sm:$0xf]
        %v835 = vld [vmem:[#allocation6 + $0x40] sm:$0xf]
        %v836 = vld [vmem:[#allocation6 + $0x44] sm:$0xf]
        %v837 = vld [vmem:[#allocation6 + $0x48] sm:$0xf]
        %v838 = vld [vmem:[#allocation6 + $0x4c] sm:$0xf]
        %v839 = vld [vmem:[#allocation6 + $0x50] sm:$0xf]
        %v840 = vld [vmem:[#allocation6 + $0x54] sm:$0xf]
        %v841 = vld [vmem:[#allocation6 + $0x58] sm:$0xf]
        %v842 = vld [vmem:[#allocation6 + $0x5c] sm:$0xf]
        %v843 = vld [vmem:[#allocation6 + $0x60] sm:$0xf]
        %v844 = vld [vmem:[#allocation6 + $0x64] sm:$0xf]
        %v845 = vld [vmem:[#allocation6 + $0x68] sm:$0xf]
        %v846 = vld [vmem:[#allocation6 + $0x6c] sm:$0xf]
        %v847 = vld [vmem:[#allocation6 + $0x70] sm:$0xf]
        %v848 = vld [vmem:[#allocation6 + $0x74] sm:$0xf]
        %v849 = vld [vmem:[#allocation6 + $0x78] sm:$0xf]
        %v850 = vld [vmem:[#allocation6 + $0x7c] sm:$0xf]
        %v851 = vld [vmem:[#allocation6 + $0x80] sm:$0xf]
        %v852 = vld [vmem:[#allocation6 + $0x84] sm:$0xf]
        %v853 = vld [vmem:[#allocation6 + $0x88] sm:$0xf]
        %v854 = vld [vmem:[#allocation6 + $0x8c] sm:$0xf]
        %v855 = vld [vmem:[#allocation6 + $0x90] sm:$0xf]
        %v856 = vld [vmem:[#allocation6 + $0x94] sm:$0xf]
        %v857 = vld [vmem:[#allocation6 + $0x98] sm:$0xf]
        %v858 = vld [vmem:[#allocation6 + $0x9c] sm:$0xf]
        %v859 = vld [vmem:[#allocation6 + $0xa0] sm:$0xf]
        %v860 = vld [vmem:[#allocation6 + $0xa4] sm:$0xf]
        %v861 = vld [vmem:[#allocation6 + $0xa8] sm:$0xf]
        %v862 = vld [vmem:[#allocation6 + $0xac] sm:$0xf]
        %v863 = vld [vmem:[#allocation6 + $0xb0] sm:$0xf]
        %v864 = vld [vmem:[#allocation6 + $0xb4] sm:$0xf]
        %v865 = vld [vmem:[#allocation6 + $0xb8] sm:$0xf]
        %v866 = vld [vmem:[#allocation6 + $0xbc] sm:$0xf]
        %v867 = vld [vmem:[#allocation6 + $0xc0] sm:$0xf]
        %v868 = vld [vmem:[#allocation6 + $0xc4] sm:$0xf]
        %v869 = vld [vmem:[#allocation6 + $0xc8] sm:$0xf]
        %v870 = vld [vmem:[#allocation6 + $0xcc] sm:$0xf]
        %v871 = vld [vmem:[#allocation6 + $0xd0] sm:$0xf]
        %v872 = vld [vmem:[#allocation6 + $0xd4] sm:$0xf]
        %v873 = vld [vmem:[#allocation6 + $0xd8] sm:$0xf]
        %v874 = vld [vmem:[#allocation6 + $0xdc] sm:$0xf]
        %v875 = vld [vmem:[#allocation6 + $0xe0] sm:$0xf]
        %v876 = vld [vmem:[#allocation6 + $0xe4] sm:$0xf]
        %v877 = vld [vmem:[#allocation6 + $0xe8] sm:$0xf]
        %v878 = vld [vmem:[#allocation6 + $0xec] sm:$0xf]
        %v879 = vld [vmem:[#allocation6 + $0xf0] sm:$0xf]
        %v880 = vld [vmem:[#allocation6 + $0xf4] sm:$0xf]
        %v881 = vld [vmem:[#allocation6 + $0xf8] sm:$0xf]
        %v882 = vld [vmem:[#allocation6 + $0xfc] sm:$0xf]
        %v947 = vunpack.c.l.b16 %v819
        %v948 = vunpack.c.l.b16 %v820
        %v949 = vunpack.c.l.b16 %v821
        %v950 = vunpack.c.l.b16 %v822
        %v951 = vunpack.c.l.b16 %v823
        %v952 = vunpack.c.l.b16 %v824
        %v953 = vunpack.c.l.b16 %v825
        %v954 = vunpack.c.l.b16 %v826
        %v955 = vunpack.c.l.b16 %v827
        %v956 = vunpack.c.l.b16 %v828
        %v957 = vunpack.c.l.b16 %v829
        %v958 = vunpack.c.l.b16 %v830
        %v959 = vunpack.c.l.b16 %v831
        %v960 = vunpack.c.l.b16 %v832
        %v961 = vunpack.c.l.b16 %v833
        %v962 = vunpack.c.l.b16 %v834
        %v963 = vunpack.c.l.b16 %v835
        %v964 = vunpack.c.l.b16 %v836
        %v965 = vunpack.c.l.b16 %v837
        %v966 = vunpack.c.l.b16 %v838
        %v967 = vunpack.c.l.b16 %v839
        %v968 = vunpack.c.l.b16 %v840
        %v969 = vunpack.c.l.b16 %v841
        %v970 = vunpack.c.l.b16 %v842
        %v971 = vunpack.c.l.b16 %v843
        %v972 = vunpack.c.l.b16 %v844
        %v973 = vunpack.c.l.b16 %v845
        %v974 = vunpack.c.l.b16 %v846
        %v975 = vunpack.c.l.b16 %v847
        %v976 = vunpack.c.l.b16 %v848
        %v977 = vunpack.c.l.b16 %v849
        %v978 = vunpack.c.l.b16 %v850
        %v979 = vunpack.c.l.b16 %v851
        %v980 = vunpack.c.l.b16 %v852
        %v981 = vunpack.c.l.b16 %v853
        %v982 = vunpack.c.l.b16 %v854
        %v983 = vunpack.c.l.b16 %v855
        %v984 = vunpack.c.l.b16 %v856
        %v985 = vunpack.c.l.b16 %v857
        %v986 = vunpack.c.l.b16 %v858
        %v987 = vunpack.c.l.b16 %v859
        %v988 = vunpack.c.l.b16 %v860
        %v989 = vunpack.c.l.b16 %v861
        %v990 = vunpack.c.l.b16 %v862
        %v991 = vunpack.c.l.b16 %v863
        %v992 = vunpack.c.l.b16 %v864
        %v993 = vunpack.c.l.b16 %v865
        %v994 = vunpack.c.l.b16 %v866
        %v995 = vunpack.c.l.b16 %v867
        %v996 = vunpack.c.l.b16 %v868
        %v997 = vunpack.c.l.b16 %v869
        %v998 = vunpack.c.l.b16 %v870
        %v999 = vunpack.c.l.b16 %v871
        %v1000 = vunpack.c.l.b16 %v872
        %v1001 = vunpack.c.l.b16 %v873
        %v1002 = vunpack.c.l.b16 %v874
        %v1003 = vunpack.c.l.b16 %v875
        %v1004 = vunpack.c.l.b16 %v876
        %v1005 = vunpack.c.l.b16 %v877
        %v1006 = vunpack.c.l.b16 %v878
        %v1007 = vunpack.c.l.b16 %v879
        %v1008 = vunpack.c.l.b16 %v880
        %v1009 = vunpack.c.l.b16 %v881
        %v1010 = vunpack.c.l.b16 %v882
        %v1011 = vpack.c.b16 %v948, %v947
        %v1012 = vpack.c.b16 %v950, %v949
        %v1013 = vpack.c.b16 %v952, %v951
        %v1014 = vpack.c.b16 %v954, %v953
        %v1015 = vpack.c.b16 %v956, %v955
        %v1016 = vpack.c.b16 %v958, %v957
        %v1017 = vpack.c.b16 %v960, %v959
        %v1018 = vpack.c.b16 %v962, %v961
        %v1019 = vpack.c.b16 %v964, %v963
        %v1020 = vpack.c.b16 %v966, %v965
        %v1021 = vpack.c.b16 %v968, %v967
        %v1022 = vpack.c.b16 %v970, %v969
        %v1023 = vpack.c.b16 %v972, %v971
        %v1024 = vpack.c.b16 %v974, %v973
        %v1025 = vpack.c.b16 %v976, %v975
        %v1026 = vpack.c.b16 %v978, %v977
        %v1027 = vpack.c.b16 %v980, %v979
        %v1028 = vpack.c.b16 %v982, %v981
        %v1029 = vpack.c.b16 %v984, %v983
        %v1030 = vpack.c.b16 %v986, %v985
        %v1031 = vpack.c.b16 %v988, %v987
        %v1032 = vpack.c.b16 %v990, %v989
        %v1033 = vpack.c.b16 %v992, %v991
        %v1034 = vpack.c.b16 %v994, %v993
        %v1035 = vpack.c.b16 %v996, %v995
        %v1036 = vpack.c.b16 %v998, %v997
        %v1037 = vpack.c.b16 %v1000, %v999
        %v1038 = vpack.c.b16 %v1002, %v1001
        %v1039 = vpack.c.b16 %v1004, %v1003
        %v1040 = vpack.c.b16 %v1006, %v1005
        %v1041 = vpack.c.b16 %v1008, %v1007
        %v1042 = vpack.c.b16 %v1010, %v1009
        %1075 = vmatpush.bf16.msra.mxu0 %v1018
        %1076 = vmatpush.bf16.msra.mxu0 %v1017
        %1077 = vmatpush.bf16.msra.mxu0 %v1016
        %1078 = vmatpush.bf16.msra.mxu0 %v1015
        %1079 = vmatpush.bf16.msra.mxu0 %v1014
        %1080 = vmatpush.bf16.msra.mxu0 %v1013
        %1081 = vmatpush.bf16.msra.mxu0 %v1012
        %1082 = vmatpush.bf16.msra.mxu0 %v1011
        %1083 = vmatmul.bf16.gmra.mxu0 %v723
        %v1084 = vpop.f32.mrf.mxu0
        %v1085 = vadd.f32 0.0, %v1084
        %v1086 = vpop.f32.mrf.mxu0
        %v1087 = vadd.f32 0.0, %v1086
        %1088 = vmatmul.bf16.gmra.mxu0 %v727
        %v1089 = vpop.f32.mrf.mxu0
        %v1090 = vadd.f32 0.0, %v1089
        %v1091 = vpop.f32.mrf.mxu0
        %v1092 = vadd.f32 0.0, %v1091
        %1093 = vmatmul.bf16.gmra.mxu0 %v731
        %v1094 = vpop.f32.mrf.mxu0
        %v1095 = vadd.f32 0.0, %v1094
        %v1096 = vpop.f32.mrf.mxu0
        %v1097 = vadd.f32 0.0, %v1096
        %1098 = vmatmul.bf16.gmra.mxu0 %v735
        %v1099 = vpop.f32.mrf.mxu0
        %v1100 = vadd.f32 0.0, %v1099
        %v1101 = vpop.f32.mrf.mxu0
        %v1102 = vadd.f32 0.0, %v1101
        %1103 = vmatmul.bf16.gmra.mxu0 %v739
        %v1104 = vpop.f32.mrf.mxu0
        %v1105 = vadd.f32 0.0, %v1104
        %v1106 = vpop.f32.mrf.mxu0
        %v1107 = vadd.f32 0.0, %v1106
        %1108 = vmatmul.bf16.gmra.mxu0 %v743
        %v1109 = vpop.f32.mrf.mxu0
        %v1110 = vadd.f32 0.0, %v1109
        %v1111 = vpop.f32.mrf.mxu0
        %v1112 = vadd.f32 0.0, %v1111
        %1113 = vmatmul.bf16.gmra.mxu0 %v747
        %v1114 = vpop.f32.mrf.mxu0
        %v1115 = vadd.f32 0.0, %v1114
        %v1116 = vpop.f32.mrf.mxu0
        %v1117 = vadd.f32 0.0, %v1116
        %1118 = vmatmul.bf16.gmra.mxu0 %v751
        %v1119 = vpop.f32.mrf.mxu0
        %v1120 = vadd.f32 0.0, %v1119
        %v1121 = vpop.f32.mrf.mxu0
        %v1122 = vadd.f32 0.0, %v1121
        %1123 = vmatmul.bf16.gmra.mxu0 %v755
        %v1124 = vpop.f32.mrf.mxu0
        %v1125 = vadd.f32 0.0, %v1124
        %v1126 = vpop.f32.mrf.mxu0
        %v1127 = vadd.f32 0.0, %v1126
        %1128 = vmatmul.bf16.gmra.mxu0 %v759
        %v1129 = vpop.f32.mrf.mxu0
        %v1130 = vadd.f32 0.0, %v1129
        %v1131 = vpop.f32.mrf.mxu0
        %v1132 = vadd.f32 0.0, %v1131
        %1133 = vmatmul.bf16.gmra.mxu0 %v763
        %v1134 = vpop.f32.mrf.mxu0
        %v1135 = vadd.f32 0.0, %v1134
        %v1136 = vpop.f32.mrf.mxu0
        %v1137 = vadd.f32 0.0, %v1136
        %1138 = vmatmul.bf16.gmra.mxu0 %v767
        %v1139 = vpop.f32.mrf.mxu0
        %v1140 = vadd.f32 0.0, %v1139
        %v1141 = vpop.f32.mrf.mxu0
        %v1142 = vadd.f32 0.0, %v1141
        %1143 = vmatmul.bf16.gmra.mxu0 %v771
        %v1144 = vpop.f32.mrf.mxu0
        %v1145 = vadd.f32 0.0, %v1144
        %v1146 = vpop.f32.mrf.mxu0
        %v1147 = vadd.f32 0.0, %v1146
        %1148 = vmatmul.bf16.gmra.mxu0 %v775
        %v1149 = vpop.f32.mrf.mxu0
        %v1150 = vadd.f32 0.0, %v1149
        %v1151 = vpop.f32.mrf.mxu0
        %v1152 = vadd.f32 0.0, %v1151
        %1153 = vmatmul.bf16.gmra.mxu0 %v779
        %v1154 = vpop.f32.mrf.mxu0
        %v1155 = vadd.f32 0.0, %v1154
        %v1156 = vpop.f32.mrf.mxu0
        %v1157 = vadd.f32 0.0, %v1156
        %1158 = vmatmul.bf16.gmra.mxu0 %v783
        %v1159 = vpop.f32.mrf.mxu0
        %v1160 = vadd.f32 0.0, %v1159
        %v1161 = vpop.f32.mrf.mxu0
        %v1162 = vadd.f32 0.0, %v1161
        %1163 = vdwg.mxu0
        %1164 = vmatpush.bf16.msra.mxu0 %v1026
        %1165 = vmatpush.bf16.msra.mxu0 %v1025
        %1166 = vmatpush.bf16.msra.mxu0 %v1024
        %1167 = vmatpush.bf16.msra.mxu0 %v1023
        %1168 = vmatpush.bf16.msra.mxu0 %v1022
        %1169 = vmatpush.bf16.msra.mxu0 %v1021
        %1170 = vmatpush.bf16.msra.mxu0 %v1020
        %1171 = vmatpush.bf16.msra.mxu0 %v1019
        %1172 = vmatmul.bf16.gmra.mxu0 %v724
        %v1173 = vpop.f32.mrf.mxu0
        %v1174 = vadd.f32 %v1085, %v1173
        %v1175 = vpop.f32.mrf.mxu0
        %v1176 = vadd.f32 %v1087, %v1175
        %1177 = vmatmul.bf16.gmra.mxu0 %v728
        %v1178 = vpop.f32.mrf.mxu0
        %v1179 = vadd.f32 %v1090, %v1178
        %v1180 = vpop.f32.mrf.mxu0
        %v1181 = vadd.f32 %v1092, %v1180
        %1182 = vmatmul.bf16.gmra.mxu0 %v732
        %v1183 = vpop.f32.mrf.mxu0
        %v1184 = vadd.f32 %v1095, %v1183
        %v1185 = vpop.f32.mrf.mxu0
        %v1186 = vadd.f32 %v1097, %v1185
        %1187 = vmatmul.bf16.gmra.mxu0 %v736
        %v1188 = vpop.f32.mrf.mxu0
        %v1189 = vadd.f32 %v1100, %v1188
        %v1190 = vpop.f32.mrf.mxu0
        %v1191 = vadd.f32 %v1102, %v1190
        %1192 = vmatmul.bf16.gmra.mxu0 %v740
        %v1193 = vpop.f32.mrf.mxu0
        %v1194 = vadd.f32 %v1105, %v1193
        %v1195 = vpop.f32.mrf.mxu0
        %v1196 = vadd.f32 %v1107, %v1195
        %1197 = vmatmul.bf16.gmra.mxu0 %v744
        %v1198 = vpop.f32.mrf.mxu0
        %v1199 = vadd.f32 %v1110, %v1198
        %v1200 = vpop.f32.mrf.mxu0
        %v1201 = vadd.f32 %v1112, %v1200
        %1202 = vmatmul.bf16.gmra.mxu0 %v748
        %v1203 = vpop.f32.mrf.mxu0
        %v1204 = vadd.f32 %v1115, %v1203
        %v1205 = vpop.f32.mrf.mxu0
        %v1206 = vadd.f32 %v1117, %v1205
        %1207 = vmatmul.bf16.gmra.mxu0 %v752
        %v1208 = vpop.f32.mrf.mxu0
        %v1209 = vadd.f32 %v1120, %v1208
        %v1210 = vpop.f32.mrf.mxu0
        %v1211 = vadd.f32 %v1122, %v1210
        %1212 = vmatmul.bf16.gmra.mxu0 %v756
        %v1213 = vpop.f32.mrf.mxu0
        %v1214 = vadd.f32 %v1125, %v1213
        %v1215 = vpop.f32.mrf.mxu0
        %v1216 = vadd.f32 %v1127, %v1215
        %1217 = vmatmul.bf16.gmra.mxu0 %v760
        %v1218 = vpop.f32.mrf.mxu0
        %v1219 = vadd.f32 %v1130, %v1218
        %v1220 = vpop.f32.mrf.mxu0
        %v1221 = vadd.f32 %v1132, %v1220
        %1222 = vmatmul.bf16.gmra.mxu0 %v764
        %v1223 = vpop.f32.mrf.mxu0
        %v1224 = vadd.f32 %v1135, %v1223
        %v1225 = vpop.f32.mrf.mxu0
        %v1226 = vadd.f32 %v1137, %v1225
        %1227 = vmatmul.bf16.gmra.mxu0 %v768
        %v1228 = vpop.f32.mrf.mxu0
        %v1229 = vadd.f32 %v1140, %v1228
        %v1230 = vpop.f32.mrf.mxu0
        %v1231 = vadd.f32 %v1142, %v1230
        %1232 = vmatmul.bf16.gmra.mxu0 %v772
        %v1233 = vpop.f32.mrf.mxu0
        %v1234 = vadd.f32 %v1145, %v1233
        %v1235 = vpop.f32.mrf.mxu0
        %v1236 = vadd.f32 %v1147, %v1235
        %1237 = vmatmul.bf16.gmra.mxu0 %v776
        %v1238 = vpop.f32.mrf.mxu0
        %v1239 = vadd.f32 %v1150, %v1238
        %v1240 = vpop.f32.mrf.mxu0
        %v1241 = vadd.f32 %v1152, %v1240
        %1242 = vmatmul.bf16.gmra.mxu0 %v780
        %v1243 = vpop.f32.mrf.mxu0
        %v1244 = vadd.f32 %v1155, %v1243
        %v1245 = vpop.f32.mrf.mxu0
        %v1246 = vadd.f32 %v1157, %v1245
        %1247 = vmatmul.bf16.gmra.mxu0 %v784
        %v1248 = vpop.f32.mrf.mxu0
        %v1249 = vadd.f32 %v1160, %v1248
        %v1250 = vpop.f32.mrf.mxu0
        %v1251 = vadd.f32 %v1162, %v1250
        %1252 = vdwg.mxu0
        %1253 = vmatpush.bf16.msra.mxu0 %v1034
        %1254 = vmatpush.bf16.msra.mxu0 %v1033
        %1255 = vmatpush.bf16.msra.mxu0 %v1032
        %1256 = vmatpush.bf16.msra.mxu0 %v1031
        %1257 = vmatpush.bf16.msra.mxu0 %v1030
        %1258 = vmatpush.bf16.msra.mxu0 %v1029
        %1259 = vmatpush.bf16.msra.mxu0 %v1028
        %1260 = vmatpush.bf16.msra.mxu0 %v1027
        %1261 = vmatmul.bf16.gmra.mxu0 %v725
        %v1262 = vpop.f32.mrf.mxu0
        %v1263 = vadd.f32 %v1174, %v1262
        %v1264 = vpop.f32.mrf.mxu0
        %v1265 = vadd.f32 %v1176, %v1264
        %1266 = vmatmul.bf16.gmra.mxu0 %v729
        %v1267 = vpop.f32.mrf.mxu0
        %v1268 = vadd.f32 %v1179, %v1267
        %v1269 = vpop.f32.mrf.mxu0
        %v1270 = vadd.f32 %v1181, %v1269
        %1271 = vmatmul.bf16.gmra.mxu0 %v733
        %v1272 = vpop.f32.mrf.mxu0
        %v1273 = vadd.f32 %v1184, %v1272
        %v1274 = vpop.f32.mrf.mxu0
        %v1275 = vadd.f32 %v1186, %v1274
        %1276 = vmatmul.bf16.gmra.mxu0 %v737
        %v1277 = vpop.f32.mrf.mxu0
        %v1278 = vadd.f32 %v1189, %v1277
        %v1279 = vpop.f32.mrf.mxu0
        %v1280 = vadd.f32 %v1191, %v1279
        %1281 = vmatmul.bf16.gmra.mxu0 %v741
        %v1282 = vpop.f32.mrf.mxu0
        %v1283 = vadd.f32 %v1194, %v1282
        %v1284 = vpop.f32.mrf.mxu0
        %v1285 = vadd.f32 %v1196, %v1284
        %1286 = vmatmul.bf16.gmra.mxu0 %v745
        %v1287 = vpop.f32.mrf.mxu0
        %v1288 = vadd.f32 %v1199, %v1287
        %v1289 = vpop.f32.mrf.mxu0
        %v1290 = vadd.f32 %v1201, %v1289
        %1291 = vmatmul.bf16.gmra.mxu0 %v749
        %v1292 = vpop.f32.mrf.mxu0
        %v1293 = vadd.f32 %v1204, %v1292
        %v1294 = vpop.f32.mrf.mxu0
        %v1295 = vadd.f32 %v1206, %v1294
        %1296 = vmatmul.bf16.gmra.mxu0 %v753
        %v1297 = vpop.f32.mrf.mxu0
        %v1298 = vadd.f32 %v1209, %v1297
        %v1299 = vpop.f32.mrf.mxu0
        %v1300 = vadd.f32 %v1211, %v1299
        %1301 = vmatmul.bf16.gmra.mxu0 %v757
        %v1302 = vpop.f32.mrf.mxu0
        %v1303 = vadd.f32 %v1214, %v1302
        %v1304 = vpop.f32.mrf.mxu0
        %v1305 = vadd.f32 %v1216, %v1304
        %1306 = vmatmul.bf16.gmra.mxu0 %v761
        %v1307 = vpop.f32.mrf.mxu0
        %v1308 = vadd.f32 %v1219, %v1307
        %v1309 = vpop.f32.mrf.mxu0
        %v1310 = vadd.f32 %v1221, %v1309
        %1311 = vmatmul.bf16.gmra.mxu0 %v765
        %v1312 = vpop.f32.mrf.mxu0
        %v1313 = vadd.f32 %v1224, %v1312
        %v1314 = vpop.f32.mrf.mxu0
        %v1315 = vadd.f32 %v1226, %v1314
        %1316 = vmatmul.bf16.gmra.mxu0 %v769
        %v1317 = vpop.f32.mrf.mxu0
        %v1318 = vadd.f32 %v1229, %v1317
        %v1319 = vpop.f32.mrf.mxu0
        %v1320 = vadd.f32 %v1231, %v1319
        %1321 = vmatmul.bf16.gmra.mxu0 %v773
        %v1322 = vpop.f32.mrf.mxu0
        %v1323 = vadd.f32 %v1234, %v1322
        %v1324 = vpop.f32.mrf.mxu0
        %v1325 = vadd.f32 %v1236, %v1324
        %1326 = vmatmul.bf16.gmra.mxu0 %v777
        %v1327 = vpop.f32.mrf.mxu0
        %v1328 = vadd.f32 %v1239, %v1327
        %v1329 = vpop.f32.mrf.mxu0
        %v1330 = vadd.f32 %v1241, %v1329
        %1331 = vmatmul.bf16.gmra.mxu0 %v781
        %v1332 = vpop.f32.mrf.mxu0
        %v1333 = vadd.f32 %v1244, %v1332
        %v1334 = vpop.f32.mrf.mxu0
        %v1335 = vadd.f32 %v1246, %v1334
        %1336 = vmatmul.bf16.gmra.mxu0 %v785
        %v1337 = vpop.f32.mrf.mxu0
        %v1338 = vadd.f32 %v1249, %v1337
        %v1339 = vpop.f32.mrf.mxu0
        %v1340 = vadd.f32 %v1251, %v1339
        %1341 = vdwg.mxu0
        %1342 = vmatpush.bf16.msra.mxu0 %v1042
        %1343 = vmatpush.bf16.msra.mxu0 %v1041
        %1344 = vmatpush.bf16.msra.mxu0 %v1040
        %1345 = vmatpush.bf16.msra.mxu0 %v1039
        %1346 = vmatpush.bf16.msra.mxu0 %v1038
        %1347 = vmatpush.bf16.msra.mxu0 %v1037
        %1348 = vmatpush.bf16.msra.mxu0 %v1036
        %1349 = vmatpush.bf16.msra.mxu0 %v1035
        %1350 = vmatmul.bf16.gmra.mxu0 %v726
        %v1351 = vpop.f32.mrf.mxu0
        %v1352 = vadd.f32 %v1263, %v1351
        %v1353 = vpop.f32.mrf.mxu0
        %v1354 = vadd.f32 %v1265, %v1353
        %1355 = vmatmul.bf16.gmra.mxu0 %v730
        %v1356 = vpop.f32.mrf.mxu0
        %v1357 = vadd.f32 %v1268, %v1356
        %v1358 = vpop.f32.mrf.mxu0
        %v1359 = vadd.f32 %v1270, %v1358
        %1360 = vmatmul.bf16.gmra.mxu0 %v734
        %v1361 = vpop.f32.mrf.mxu0
        %v1362 = vadd.f32 %v1273, %v1361
        %v1363 = vpop.f32.mrf.mxu0
        %v1364 = vadd.f32 %v1275, %v1363
        %1365 = vmatmul.bf16.gmra.mxu0 %v738
        %v1366 = vpop.f32.mrf.mxu0
        %v1367 = vadd.f32 %v1278, %v1366
        %v1368 = vpop.f32.mrf.mxu0
        %v1369 = vadd.f32 %v1280, %v1368
        %1370 = vmatmul.bf16.gmra.mxu0 %v742
        %v1371 = vpop.f32.mrf.mxu0
        %v1372 = vadd.f32 %v1283, %v1371
        %v1373 = vpop.f32.mrf.mxu0
        %v1374 = vadd.f32 %v1285, %v1373
        %1375 = vmatmul.bf16.gmra.mxu0 %v746
        %v1376 = vpop.f32.mrf.mxu0
        %v1377 = vadd.f32 %v1288, %v1376
        %v1378 = vpop.f32.mrf.mxu0
        %v1379 = vadd.f32 %v1290, %v1378
        %1380 = vmatmul.bf16.gmra.mxu0 %v750
        %v1381 = vpop.f32.mrf.mxu0
        %v1382 = vadd.f32 %v1293, %v1381
        %v1383 = vpop.f32.mrf.mxu0
        %v1384 = vadd.f32 %v1295, %v1383
        %1385 = vmatmul.bf16.gmra.mxu0 %v754
        %v1386 = vpop.f32.mrf.mxu0
        %v1387 = vadd.f32 %v1298, %v1386
        %v1388 = vpop.f32.mrf.mxu0
        %v1389 = vadd.f32 %v1300, %v1388
        %1390 = vmatmul.bf16.gmra.mxu0 %v758
        %v1391 = vpop.f32.mrf.mxu0
        %v1392 = vadd.f32 %v1303, %v1391
        %v1393 = vpop.f32.mrf.mxu0
        %v1394 = vadd.f32 %v1305, %v1393
        %1395 = vmatmul.bf16.gmra.mxu0 %v762
        %v1396 = vpop.f32.mrf.mxu0
        %v1397 = vadd.f32 %v1308, %v1396
        %v1398 = vpop.f32.mrf.mxu0
        %v1399 = vadd.f32 %v1310, %v1398
        %1400 = vmatmul.bf16.gmra.mxu0 %v766
        %v1401 = vpop.f32.mrf.mxu0
        %v1402 = vadd.f32 %v1313, %v1401
        %v1403 = vpop.f32.mrf.mxu0
        %v1404 = vadd.f32 %v1315, %v1403
        %1405 = vmatmul.bf16.gmra.mxu0 %v770
        %v1406 = vpop.f32.mrf.mxu0
        %v1407 = vadd.f32 %v1318, %v1406
        %v1408 = vpop.f32.mrf.mxu0
        %v1409 = vadd.f32 %v1320, %v1408
        %1410 = vmatmul.bf16.gmra.mxu0 %v774
        %v1411 = vpop.f32.mrf.mxu0
        %v1412 = vadd.f32 %v1323, %v1411
        %v1413 = vpop.f32.mrf.mxu0
        %v1414 = vadd.f32 %v1325, %v1413
        %1415 = vmatmul.bf16.gmra.mxu0 %v778
        %v1416 = vpop.f32.mrf.mxu0
        %v1417 = vadd.f32 %v1328, %v1416
        %v1418 = vpop.f32.mrf.mxu0
        %v1419 = vadd.f32 %v1330, %v1418
        %1420 = vmatmul.bf16.gmra.mxu0 %v782
        %v1421 = vpop.f32.mrf.mxu0
        %v1422 = vadd.f32 %v1333, %v1421
        %v1423 = vpop.f32.mrf.mxu0
        %v1424 = vadd.f32 %v1335, %v1423
        %1425 = vmatmul.bf16.gmra.mxu0 %v786
        %v1426 = vpop.f32.mrf.mxu0
        %v1427 = vadd.f32 %v1338, %v1426
        %v1428 = vpop.f32.mrf.mxu0
        %v1429 = vadd.f32 %v1340, %v1428
        %1430 = vdwg.mxu0
        %v1431 = vadd.f32 %v787, %v1352
        %v1432 = vadd.f32 %v788, %v1354
        %v1433 = vadd.f32 %v789, %v1357
        %v1434 = vadd.f32 %v790, %v1359
        %v1435 = vadd.f32 %v791, %v1362
        %v1436 = vadd.f32 %v792, %v1364
        %v1437 = vadd.f32 %v793, %v1367
        %v1438 = vadd.f32 %v794, %v1369
        %v1439 = vadd.f32 %v795, %v1372
        %v1440 = vadd.f32 %v796, %v1374
        %v1441 = vadd.f32 %v797, %v1377
        %v1442 = vadd.f32 %v798, %v1379
        %v1443 = vadd.f32 %v799, %v1382
        %v1444 = vadd.f32 %v800, %v1384
        %v1445 = vadd.f32 %v801, %v1387
        %v1446 = vadd.f32 %v802, %v1389
        %v1447 = vadd.f32 %v803, %v1392
        %v1448 = vadd.f32 %v804, %v1394
        %v1449 = vadd.f32 %v805, %v1397
        %v1450 = vadd.f32 %v806, %v1399
        %v1451 = vadd.f32 %v807, %v1402
        %v1452 = vadd.f32 %v808, %v1404
        %v1453 = vadd.f32 %v809, %v1407
        %v1454 = vadd.f32 %v810, %v1409
        %v1455 = vadd.f32 %v811, %v1412
        %v1456 = vadd.f32 %v812, %v1414
        %v1457 = vadd.f32 %v813, %v1417
        %v1458 = vadd.f32 %v814, %v1419
        %v1459 = vadd.f32 %v815, %v1422
        %v1460 = vadd.f32 %v816, %v1424
        %v1461 = vadd.f32 %v817, %v1427
        %v1462 = vadd.f32 %v818, %v1429
        %1463 = vst [vmem:[#allocation2] sm:$0xff] %v1431
        %1464 = vst [vmem:[#allocation2 + $0x8] sm:$0xff] %v1432
        %1465 = vst [vmem:[#allocation2 + $0x10] sm:$0xff] %v1433
        %1466 = vst [vmem:[#allocation2 + $0x18] sm:$0xff] %v1434
        %1467 = vst [vmem:[#allocation2 + $0x20] sm:$0xff] %v1435
        %1468 = vst [vmem:[#allocation2 + $0x28] sm:$0xff] %v1436
        %1469 = vst [vmem:[#allocation2 + $0x30] sm:$0xff] %v1437
        %1470 = vst [vmem:[#allocation2 + $0x38] sm:$0xff] %v1438
        %1471 = vst [vmem:[#allocation2 + $0x40] sm:$0xff] %v1439
        %1472 = vst [vmem:[#allocation2 + $0x48] sm:$0xff] %v1440
        %1473 = vst [vmem:[#allocation2 + $0x50] sm:$0xff] %v1441
        %1474 = vst [vmem:[#allocation2 + $0x58] sm:$0xff] %v1442
        %1475 = vst [vmem:[#allocation2 + $0x60] sm:$0xff] %v1443
        %1476 = vst [vmem:[#allocation2 + $0x68] sm:$0xff] %v1444
        %1477 = vst [vmem:[#allocation2 + $0x70] sm:$0xff] %v1445
        %1478 = vst [vmem:[#allocation2 + $0x78] sm:$0xff] %v1446
        %1479 = vst [vmem:[#allocation2 + $0x80] sm:$0xff] %v1447
        %1480 = vst [vmem:[#allocation2 + $0x88] sm:$0xff] %v1448
        %1481 = vst [vmem:[#allocation2 + $0x90] sm:$0xff] %v1449
        %1482 = vst [vmem:[#allocation2 + $0x98] sm:$0xff] %v1450
        %1483 = vst [vmem:[#allocation2 + $0xa0] sm:$0xff] %v1451
        %1484 = vst [vmem:[#allocation2 + $0xa8] sm:$0xff] %v1452
        %1485 = vst [vmem:[#allocation2 + $0xb0] sm:$0xff] %v1453
        %1486 = vst [vmem:[#allocation2 + $0xb8] sm:$0xff] %v1454
        %1487 = vst [vmem:[#allocation2 + $0xc0] sm:$0xff] %v1455
        %1488 = vst [vmem:[#allocation2 + $0xc8] sm:$0xff] %v1456
        %1489 = vst [vmem:[#allocation2 + $0xd0] sm:$0xff] %v1457
        %1490 = vst [vmem:[#allocation2 + $0xd8] sm:$0xff] %v1458
        %1491 = vst [vmem:[#allocation2 + $0xe0] sm:$0xff] %v1459
        %1492 = vst [vmem:[#allocation2 + $0xe8] sm:$0xff] %v1460
        %1493 = vst [vmem:[#allocation2 + $0xf0] sm:$0xff] %v1461
        %1494 = vst [vmem:[#allocation2 + $0xf8] sm:$0xff] %v1462
        // Predicated region
        $region61: #{tpu_custom_call.1} parent=35 // pred_check
          %p1495 = pneg %p363
        $region62: #{tpu_custom_call.1} parent=35 // pred_check_branch
          %1497 = sbr.rel (%p1495) target = $region64
        $region63: #{tpu_custom_call.1} parent=35 // pred_region
          %v1498 = vld [vmem:[%s308] sm:$0xf]
          %v1499 = vld [vmem:[%s308 + $0x4] sm:$0xf]
          %v1500 = vld [vmem:[%s308 + $0x8] sm:$0xf]
          %v1501 = vld [vmem:[%s308 + $0xc] sm:$0xf]
          %v1502 = vld [vmem:[%s308 + $0x10] sm:$0xf]
          %v1503 = vld [vmem:[%s308 + $0x14] sm:$0xf]
          %v1504 = vld [vmem:[%s308 + $0x18] sm:$0xf]
          %v1505 = vld [vmem:[%s308 + $0x1c] sm:$0xf]
          %v1506 = vld [vmem:[%s308 + $0x20] sm:$0xf]
          %v1507 = vld [vmem:[%s308 + $0x24] sm:$0xf]
          %v1508 = vld [vmem:[%s308 + $0x28] sm:$0xf]
          %v1509 = vld [vmem:[%s308 + $0x2c] sm:$0xf]
          %v1510 = vld [vmem:[%s308 + $0x30] sm:$0xf]
          %v1511 = vld [vmem:[%s308 + $0x34] sm:$0xf]
          %v1512 = vld [vmem:[%s308 + $0x38] sm:$0xf]
          %v1513 = vld [vmem:[%s308 + $0x3c] sm:$0xf]
          %v1514 = vld [vmem:[%s308 + $0x40] sm:$0xf]
          %v1515 = vld [vmem:[%s308 + $0x44] sm:$0xf]
          %v1516 = vld [vmem:[%s308 + $0x48] sm:$0xf]
          %v1517 = vld [vmem:[%s308 + $0x4c] sm:$0xf]
          %v1518 = vld [vmem:[%s308 + $0x50] sm:$0xf]
          %v1519 = vld [vmem:[%s308 + $0x54] sm:$0xf]
          %v1520 = vld [vmem:[%s308 + $0x58] sm:$0xf]
          %v1521 = vld [vmem:[%s308 + $0x5c] sm:$0xf]
          %v1522 = vld [vmem:[%s308 + $0x60] sm:$0xf]
          %v1523 = vld [vmem:[%s308 + $0x64] sm:$0xf]
          %v1524 = vld [vmem:[%s308 + $0x68] sm:$0xf]
          %v1525 = vld [vmem:[%s308 + $0x6c] sm:$0xf]
          %v1526 = vld [vmem:[%s308 + $0x70] sm:$0xf]
          %v1527 = vld [vmem:[%s308 + $0x74] sm:$0xf]
          %v1528 = vld [vmem:[%s308 + $0x78] sm:$0xf]
          %v1529 = vld [vmem:[%s308 + $0x7c] sm:$0xf]
          %v1530 = vld [vmem:[#allocation2] sm:$0xff]
          %v1531 = vld [vmem:[#allocation2 + $0x8] sm:$0xff]
          %v1532 = vld [vmem:[#allocation2 + $0x10] sm:$0xff]
          %v1533 = vld [vmem:[#allocation2 + $0x18] sm:$0xff]
          %v1534 = vld [vmem:[#allocation2 + $0x20] sm:$0xff]
          %v1535 = vld [vmem:[#allocation2 + $0x28] sm:$0xff]
          %v1536 = vld [vmem:[#allocation2 + $0x30] sm:$0xff]
          %v1537 = vld [vmem:[#allocation2 + $0x38] sm:$0xff]
          %v1538 = vld [vmem:[#allocation2 + $0x40] sm:$0xff]
          %v1539 = vld [vmem:[#allocation2 + $0x48] sm:$0xff]
          %v1540 = vld [vmem:[#allocation2 + $0x50] sm:$0xff]
          %v1541 = vld [vmem:[#allocation2 + $0x58] sm:$0xff]
          %v1542 = vld [vmem:[#allocation2 + $0x60] sm:$0xff]
          %v1543 = vld [vmem:[#allocation2 + $0x68] sm:$0xff]
          %v1544 = vld [vmem:[#allocation2 + $0x70] sm:$0xff]
          %v1545 = vld [vmem:[#allocation2 + $0x78] sm:$0xff]
          %v1546 = vld [vmem:[#allocation2 + $0x80] sm:$0xff]
          %v1547 = vld [vmem:[#allocation2 + $0x88] sm:$0xff]
          %v1548 = vld [vmem:[#allocation2 + $0x90] sm:$0xff]
          %v1549 = vld [vmem:[#allocation2 + $0x98] sm:$0xff]
          %v1550 = vld [vmem:[#allocation2 + $0xa0] sm:$0xff]
          %v1551 = vld [vmem:[#allocation2 + $0xa8] sm:$0xff]
          %v1552 = vld [vmem:[#allocation2 + $0xb0] sm:$0xff]
          %v1553 = vld [vmem:[#allocation2 + $0xb8] sm:$0xff]
          %v1554 = vld [vmem:[#allocation2 + $0xc0] sm:$0xff]
          %v1555 = vld [vmem:[#allocation2 + $0xc8] sm:$0xff]
          %v1556 = vld [vmem:[#allocation2 + $0xd0] sm:$0xff]
          %v1557 = vld [vmem:[#allocation2 + $0xd8] sm:$0xff]
          %v1558 = vld [vmem:[#allocation2 + $0xe0] sm:$0xff]
          %v1559 = vld [vmem:[#allocation2 + $0xe8] sm:$0xff]
          %v1560 = vld [vmem:[#allocation2 + $0xf0] sm:$0xff]
          %v1561 = vld [vmem:[#allocation2 + $0xf8] sm:$0xff]
          %v1562 = vpack.c.bf16 %v1530, %v1530
          %v1563 = vpack.c.bf16 %v1531, %v1531
          %v1564 = vpack.c.bf16 %v1532, %v1532
          %v1565 = vpack.c.bf16 %v1533, %v1533
          %v1566 = vpack.c.bf16 %v1534, %v1534
          %v1567 = vpack.c.bf16 %v1535, %v1535
          %v1568 = vpack.c.bf16 %v1536, %v1536
          %v1569 = vpack.c.bf16 %v1537, %v1537
          %v1570 = vpack.c.bf16 %v1538, %v1538
          %v1571 = vpack.c.bf16 %v1539, %v1539
          %v1572 = vpack.c.bf16 %v1540, %v1540
          %v1573 = vpack.c.bf16 %v1541, %v1541
          %v1574 = vpack.c.bf16 %v1542, %v1542
          %v1575 = vpack.c.bf16 %v1543, %v1543
          %v1576 = vpack.c.bf16 %v1544, %v1544
          %v1577 = vpack.c.bf16 %v1545, %v1545
          %v1578 = vpack.c.bf16 %v1546, %v1546
          %v1579 = vpack.c.bf16 %v1547, %v1547
          %v1580 = vpack.c.bf16 %v1548, %v1548
          %v1581 = vpack.c.bf16 %v1549, %v1549
          %v1582 = vpack.c.bf16 %v1550, %v1550
          %v1583 = vpack.c.bf16 %v1551, %v1551
          %v1584 = vpack.c.bf16 %v1552, %v1552
          %v1585 = vpack.c.bf16 %v1553, %v1553
          %v1586 = vpack.c.bf16 %v1554, %v1554
          %v1587 = vpack.c.bf16 %v1555, %v1555
          %v1588 = vpack.c.bf16 %v1556, %v1556
          %v1589 = vpack.c.bf16 %v1557, %v1557
          %v1590 = vpack.c.bf16 %v1558, %v1558
          %v1591 = vpack.c.bf16 %v1559, %v1559
          %v1592 = vpack.c.bf16 %v1560, %v1560
          %v1593 = vpack.c.bf16 %v1561, %v1561
          %v1626 = vunpack.c.l.b16 %v1498
          %v1627 = vunpack.c.l.b16 %v1499
          %v1628 = vunpack.c.l.b16 %v1500
          %v1629 = vunpack.c.l.b16 %v1501
          %v1630 = vunpack.c.l.b16 %v1502
          %v1631 = vunpack.c.l.b16 %v1503
          %v1632 = vunpack.c.l.b16 %v1504
          %v1633 = vunpack.c.l.b16 %v1505
          %v1634 = vunpack.c.l.b16 %v1506
          %v1635 = vunpack.c.l.b16 %v1507
          %v1636 = vunpack.c.l.b16 %v1508
          %v1637 = vunpack.c.l.b16 %v1509
          %v1638 = vunpack.c.l.b16 %v1510
          %v1639 = vunpack.c.l.b16 %v1511
          %v1640 = vunpack.c.l.b16 %v1512
          %v1641 = vunpack.c.l.b16 %v1513
          %v1642 = vunpack.c.l.b16 %v1514
          %v1643 = vunpack.c.l.b16 %v1515
          %v1644 = vunpack.c.l.b16 %v1516
          %v1645 = vunpack.c.l.b16 %v1517
          %v1646 = vunpack.c.l.b16 %v1518
          %v1647 = vunpack.c.l.b16 %v1519
          %v1648 = vunpack.c.l.b16 %v1520
          %v1649 = vunpack.c.l.b16 %v1521
          %v1650 = vunpack.c.l.b16 %v1522
          %v1651 = vunpack.c.l.b16 %v1523
          %v1652 = vunpack.c.l.b16 %v1524
          %v1653 = vunpack.c.l.b16 %v1525
          %v1654 = vunpack.c.l.b16 %v1526
          %v1655 = vunpack.c.l.b16 %v1527
          %v1656 = vunpack.c.l.b16 %v1528
          %v1657 = vunpack.c.l.b16 %v1529
          %v1658 = vpack.c.b16 %v1627, %v1626
          %v1659 = vpack.c.b16 %v1629, %v1628
          %v1660 = vpack.c.b16 %v1631, %v1630
          %v1661 = vpack.c.b16 %v1633, %v1632
          %v1662 = vpack.c.b16 %v1635, %v1634
          %v1663 = vpack.c.b16 %v1637, %v1636
          %v1664 = vpack.c.b16 %v1639, %v1638
          %v1665 = vpack.c.b16 %v1641, %v1640
          %v1666 = vpack.c.b16 %v1643, %v1642
          %v1667 = vpack.c.b16 %v1645, %v1644
          %v1668 = vpack.c.b16 %v1647, %v1646
          %v1669 = vpack.c.b16 %v1649, %v1648
          %v1670 = vpack.c.b16 %v1651, %v1650
          %v1671 = vpack.c.b16 %v1653, %v1652
          %v1672 = vpack.c.b16 %v1655, %v1654
          %v1673 = vpack.c.b16 %v1657, %v1656
          %v1722 = vunpack.c.l.b16 %v1562
          %v1723 = vunpack.c.l.b16 %v1563
          %v1724 = vunpack.c.l.b16 %v1564
          %v1725 = vunpack.c.l.b16 %v1565
          %v1726 = vunpack.c.l.b16 %v1566
          %v1727 = vunpack.c.l.b16 %v1567
          %v1728 = vunpack.c.l.b16 %v1568
          %v1729 = vunpack.c.l.b16 %v1569
          %v1730 = vunpack.c.l.b16 %v1570
          %v1731 = vunpack.c.l.b16 %v1571
          %v1732 = vunpack.c.l.b16 %v1572
          %v1733 = vunpack.c.l.b16 %v1573
          %v1734 = vunpack.c.l.b16 %v1574
          %v1735 = vunpack.c.l.b16 %v1575
          %v1736 = vunpack.c.l.b16 %v1576
          %v1737 = vunpack.c.l.b16 %v1577
          %v1738 = vunpack.c.l.b16 %v1578
          %v1739 = vunpack.c.l.b16 %v1579
          %v1740 = vunpack.c.l.b16 %v1580
          %v1741 = vunpack.c.l.b16 %v1581
          %v1742 = vunpack.c.l.b16 %v1582
          %v1743 = vunpack.c.l.b16 %v1583
          %v1744 = vunpack.c.l.b16 %v1584
          %v1745 = vunpack.c.l.b16 %v1585
          %v1746 = vunpack.c.l.b16 %v1586
          %v1747 = vunpack.c.l.b16 %v1587
          %v1748 = vunpack.c.l.b16 %v1588
          %v1749 = vunpack.c.l.b16 %v1589
          %v1750 = vunpack.c.l.b16 %v1590
          %v1751 = vunpack.c.l.b16 %v1591
          %v1752 = vunpack.c.l.b16 %v1592
          %v1753 = vunpack.c.l.b16 %v1593
          %v1754 = vpack.c.b16 %v1723, %v1722
          %v1755 = vpack.c.b16 %v1725, %v1724
          %v1756 = vpack.c.b16 %v1727, %v1726
          %v1757 = vpack.c.b16 %v1729, %v1728
          %v1758 = vpack.c.b16 %v1731, %v1730
          %v1759 = vpack.c.b16 %v1733, %v1732
          %v1760 = vpack.c.b16 %v1735, %v1734
          %v1761 = vpack.c.b16 %v1737, %v1736
          %v1762 = vpack.c.b16 %v1739, %v1738
          %v1763 = vpack.c.b16 %v1741, %v1740
          %v1764 = vpack.c.b16 %v1743, %v1742
          %v1765 = vpack.c.b16 %v1745, %v1744
          %v1766 = vpack.c.b16 %v1747, %v1746
          %v1767 = vpack.c.b16 %v1749, %v1748
          %v1768 = vpack.c.b16 %v1751, %v1750
          %v1769 = vpack.c.b16 %v1753, %v1752
          %v1786 = vld [vmem:[%s353] sm:$0xff]
          %v1787 = vld [vmem:[%s353 + $0x8] sm:$0xff]
          %v1788 = vld [vmem:[%s353 + $0x10] sm:$0xff]
          %v1789 = vld [vmem:[%s353 + $0x18] sm:$0xff]
          %v1790 = vld [vmem:[%s353 + $0x20] sm:$0xff]
          %v1791 = vld [vmem:[%s353 + $0x28] sm:$0xff]
          %v1792 = vld [vmem:[%s353 + $0x30] sm:$0xff]
          %v1793 = vld [vmem:[%s353 + $0x38] sm:$0xff]
          %v1794 = vld [vmem:[%s353 + $0x40] sm:$0xff]
          %v1795 = vld [vmem:[%s353 + $0x48] sm:$0xff]
          %v1796 = vld [vmem:[%s353 + $0x50] sm:$0xff]
          %v1797 = vld [vmem:[%s353 + $0x58] sm:$0xff]
          %v1798 = vld [vmem:[%s353 + $0x60] sm:$0xff]
          %v1799 = vld [vmem:[%s353 + $0x68] sm:$0xff]
          %v1800 = vld [vmem:[%s353 + $0x70] sm:$0xff]
          %v1801 = vld [vmem:[%s353 + $0x78] sm:$0xff]
          %v1802 = vld [vmem:[%s353 + $0x80] sm:$0xff]
          %v1803 = vld [vmem:[%s353 + $0x88] sm:$0xff]
          %v1804 = vld [vmem:[%s353 + $0x90] sm:$0xff]
          %v1805 = vld [vmem:[%s353 + $0x98] sm:$0xff]
          %v1806 = vld [vmem:[%s353 + $0xa0] sm:$0xff]
          %v1807 = vld [vmem:[%s353 + $0xa8] sm:$0xff]
          %v1808 = vld [vmem:[%s353 + $0xb0] sm:$0xff]
          %v1809 = vld [vmem:[%s353 + $0xb8] sm:$0xff]
          %v1810 = vld [vmem:[%s353 + $0xc0] sm:$0xff]
          %v1811 = vld [vmem:[%s353 + $0xc8] sm:$0xff]
          %v1812 = vld [vmem:[%s353 + $0xd0] sm:$0xff]
          %v1813 = vld [vmem:[%s353 + $0xd8] sm:$0xff]
          %v1814 = vld [vmem:[%s353 + $0xe0] sm:$0xff]
          %v1815 = vld [vmem:[%s353 + $0xe8] sm:$0xff]
          %v1816 = vld [vmem:[%s353 + $0xf0] sm:$0xff]
          %v1817 = vld [vmem:[%s353 + $0xf8] sm:$0xff]
          %v1818 = vld [vmem:[%s318] sm:$0xff]
          %v1819 = vld [vmem:[%s318 + $0x8] sm:$0xff]
          %v1820 = vld [vmem:[%s318 + $0x10] sm:$0xff]
          %v1821 = vld [vmem:[%s318 + $0x18] sm:$0xff]
          %v1822 = vld [vmem:[%s318 + $0x20] sm:$0xff]
          %v1823 = vld [vmem:[%s318 + $0x28] sm:$0xff]
          %v1824 = vld [vmem:[%s318 + $0x30] sm:$0xff]
          %v1825 = vld [vmem:[%s318 + $0x38] sm:$0xff]
          %v1826 = vld [vmem:[%s318 + $0x40] sm:$0xff]
          %v1827 = vld [vmem:[%s318 + $0x48] sm:$0xff]
          %v1828 = vld [vmem:[%s318 + $0x50] sm:$0xff]
          %v1829 = vld [vmem:[%s318 + $0x58] sm:$0xff]
          %v1830 = vld [vmem:[%s318 + $0x60] sm:$0xff]
          %v1831 = vld [vmem:[%s318 + $0x68] sm:$0xff]
          %v1832 = vld [vmem:[%s318 + $0x70] sm:$0xff]
          %v1833 = vld [vmem:[%s318 + $0x78] sm:$0xff]
          %v1850 = vunpack.c.l.b16 %v1818
          %v1851 = vunpack.c.h.b16 %v1818
          %v1852 = vunpack.c.l.b16 %v1819
          %v1853 = vunpack.c.h.b16 %v1819
          %v1854 = vunpack.c.l.b16 %v1820
          %v1855 = vunpack.c.h.b16 %v1820
          %v1856 = vunpack.c.l.b16 %v1821
          %v1857 = vunpack.c.h.b16 %v1821
          %v1858 = vunpack.c.l.b16 %v1822
          %v1859 = vunpack.c.h.b16 %v1822
          %v1860 = vunpack.c.l.b16 %v1823
          %v1861 = vunpack.c.h.b16 %v1823
          %v1862 = vunpack.c.l.b16 %v1824
          %v1863 = vunpack.c.h.b16 %v1824
          %v1864 = vunpack.c.l.b16 %v1825
          %v1865 = vunpack.c.h.b16 %v1825
          %v1866 = vunpack.c.l.b16 %v1826
          %v1867 = vunpack.c.h.b16 %v1826
          %v1868 = vunpack.c.l.b16 %v1827
          %v1869 = vunpack.c.h.b16 %v1827
          %v1870 = vunpack.c.l.b16 %v1828
          %v1871 = vunpack.c.h.b16 %v1828
          %v1872 = vunpack.c.l.b16 %v1829
          %v1873 = vunpack.c.h.b16 %v1829
          %v1874 = vunpack.c.l.b16 %v1830
          %v1875 = vunpack.c.h.b16 %v1830
          %v1876 = vunpack.c.l.b16 %v1831
          %v1877 = vunpack.c.h.b16 %v1831
          %v1878 = vunpack.c.l.b16 %v1832
          %v1879 = vunpack.c.h.b16 %v1832
          %v1880 = vunpack.c.l.b16 %v1833
          %v1881 = vunpack.c.h.b16 %v1833
          %v1882 = vpack.c.b16 %v1852, %v1850
          %v1883 = vpack.c.b16 %v1853, %v1851
          %v1884 = vpack.c.b16 %v1856, %v1854
          %v1885 = vpack.c.b16 %v1857, %v1855
          %v1886 = vpack.c.b16 %v1860, %v1858
          %v1887 = vpack.c.b16 %v1861, %v1859
          %v1888 = vpack.c.b16 %v1864, %v1862
          %v1889 = vpack.c.b16 %v1865, %v1863
          %v1890 = vpack.c.b16 %v1868, %v1866
          %v1891 = vpack.c.b16 %v1869, %v1867
          %v1892 = vpack.c.b16 %v1872, %v1870
          %v1893 = vpack.c.b16 %v1873, %v1871
          %v1894 = vpack.c.b16 %v1876, %v1874
          %v1895 = vpack.c.b16 %v1877, %v1875
          %v1896 = vpack.c.b16 %v1880, %v1878
          %v1897 = vpack.c.b16 %v1881, %v1879
          %1914 = vmatpush.bf16.msra.mxu0 %v1665
          %1915 = vmatpush.bf16.msra.mxu0 %v1664
          %1916 = vmatpush.bf16.msra.mxu0 %v1663
          %1917 = vmatpush.bf16.msra.mxu0 %v1662
          %1918 = vmatpush.bf16.msra.mxu0 %v1661
          %1919 = vmatpush.bf16.msra.mxu0 %v1660
          %1920 = vmatpush.bf16.msra.mxu0 %v1659
          %1921 = vmatpush.bf16.msra.mxu0 %v1658
          %1922 = vmatmul.bf16.gmra.mxu0 %v1882
          %v1923 = vpop.f32.mrf.mxu0
          %v1924 = vadd.f32 0.0, %v1923
          %v1925 = vpop.f32.mrf.mxu0
          %v1926 = vadd.f32 0.0, %v1925
          %1927 = vmatmul.bf16.gmra.mxu0 %v1884
          %v1928 = vpop.f32.mrf.mxu0
          %v1929 = vadd.f32 0.0, %v1928
          %v1930 = vpop.f32.mrf.mxu0
          %v1931 = vadd.f32 0.0, %v1930
          %1932 = vmatmul.bf16.gmra.mxu0 %v1886
          %v1933 = vpop.f32.mrf.mxu0
          %v1934 = vadd.f32 0.0, %v1933
          %v1935 = vpop.f32.mrf.mxu0
          %v1936 = vadd.f32 0.0, %v1935
          %1937 = vmatmul.bf16.gmra.mxu0 %v1888
          %v1938 = vpop.f32.mrf.mxu0
          %v1939 = vadd.f32 0.0, %v1938
          %v1940 = vpop.f32.mrf.mxu0
          %v1941 = vadd.f32 0.0, %v1940
          %1942 = vmatmul.bf16.gmra.mxu0 %v1890
          %v1943 = vpop.f32.mrf.mxu0
          %v1944 = vadd.f32 0.0, %v1943
          %v1945 = vpop.f32.mrf.mxu0
          %v1946 = vadd.f32 0.0, %v1945
          %1947 = vmatmul.bf16.gmra.mxu0 %v1892
          %v1948 = vpop.f32.mrf.mxu0
          %v1949 = vadd.f32 0.0, %v1948
          %v1950 = vpop.f32.mrf.mxu0
          %v1951 = vadd.f32 0.0, %v1950
          %1952 = vmatmul.bf16.gmra.mxu0 %v1894
          %v1953 = vpop.f32.mrf.mxu0
          %v1954 = vadd.f32 0.0, %v1953
          %v1955 = vpop.f32.mrf.mxu0
          %v1956 = vadd.f32 0.0, %v1955
          %1957 = vmatmul.bf16.gmra.mxu0 %v1896
          %v1958 = vpop.f32.mrf.mxu0
          %v1959 = vadd.f32 0.0, %v1958
          %v1960 = vpop.f32.mrf.mxu0
          %v1961 = vadd.f32 0.0, %v1960
          %1962 = vdwg.mxu0
          %1963 = vmatpush.bf16.msra.mxu0 %v1673
          %1964 = vmatpush.bf16.msra.mxu0 %v1672
          %1965 = vmatpush.bf16.msra.mxu0 %v1671
          %1966 = vmatpush.bf16.msra.mxu0 %v1670
          %1967 = vmatpush.bf16.msra.mxu0 %v1669
          %1968 = vmatpush.bf16.msra.mxu0 %v1668
          %1969 = vmatpush.bf16.msra.mxu0 %v1667
          %1970 = vmatpush.bf16.msra.mxu0 %v1666
          %1971 = vmatmul.bf16.gmra.mxu0 %v1883
          %v1972 = vpop.f32.mrf.mxu0
          %v1973 = vadd.f32 %v1924, %v1972
          %v1974 = vpop.f32.mrf.mxu0
          %v1975 = vadd.f32 %v1926, %v1974
          %1976 = vmatmul.bf16.gmra.mxu0 %v1885
          %v1977 = vpop.f32.mrf.mxu0
          %v1978 = vadd.f32 %v1929, %v1977
          %v1979 = vpop.f32.mrf.mxu0
          %v1980 = vadd.f32 %v1931, %v1979
          %1981 = vmatmul.bf16.gmra.mxu0 %v1887
          %v1982 = vpop.f32.mrf.mxu0
          %v1983 = vadd.f32 %v1934, %v1982
          %v1984 = vpop.f32.mrf.mxu0
          %v1985 = vadd.f32 %v1936, %v1984
          %1986 = vmatmul.bf16.gmra.mxu0 %v1889
          %v1987 = vpop.f32.mrf.mxu0
          %v1988 = vadd.f32 %v1939, %v1987
          %v1989 = vpop.f32.mrf.mxu0
          %v1990 = vadd.f32 %v1941, %v1989
          %1991 = vmatmul.bf16.gmra.mxu0 %v1891
          %v1992 = vpop.f32.mrf.mxu0
          %v1993 = vadd.f32 %v1944, %v1992
          %v1994 = vpop.f32.mrf.mxu0
          %v1995 = vadd.f32 %v1946, %v1994
          %1996 = vmatmul.bf16.gmra.mxu0 %v1893
          %v1997 = vpop.f32.mrf.mxu0
          %v1998 = vadd.f32 %v1949, %v1997
          %v1999 = vpop.f32.mrf.mxu0
          %v2000 = vadd.f32 %v1951, %v1999
          %2001 = vmatmul.bf16.gmra.mxu0 %v1895
          %v2002 = vpop.f32.mrf.mxu0
          %v2003 = vadd.f32 %v1954, %v2002
          %v2004 = vpop.f32.mrf.mxu0
          %v2005 = vadd.f32 %v1956, %v2004
          %2006 = vmatmul.bf16.gmra.mxu0 %v1897
          %v2007 = vpop.f32.mrf.mxu0
          %v2008 = vadd.f32 %v1959, %v2007
          %v2009 = vpop.f32.mrf.mxu0
          %v2010 = vadd.f32 %v1961, %v2009
          %2011 = vdwg.mxu0
          %2012 = vmatpush.bf16.msra.mxu0 %v1761
          %2013 = vmatpush.bf16.msra.mxu0 %v1760
          %2014 = vmatpush.bf16.msra.mxu0 %v1759
          %2015 = vmatpush.bf16.msra.mxu0 %v1758
          %2016 = vmatpush.bf16.msra.mxu0 %v1757
          %2017 = vmatpush.bf16.msra.mxu0 %v1756
          %2018 = vmatpush.bf16.msra.mxu0 %v1755
          %2019 = vmatpush.bf16.msra.mxu0 %v1754
          %2020 = vmatmul.bf16.gmra.mxu0 %v1882
          %v2021 = vpop.f32.mrf.mxu0
          %v2022 = vadd.f32 0.0, %v2021
          %v2023 = vpop.f32.mrf.mxu0
          %v2024 = vadd.f32 0.0, %v2023
          %2025 = vmatmul.bf16.gmra.mxu0 %v1884
          %v2026 = vpop.f32.mrf.mxu0
          %v2027 = vadd.f32 0.0, %v2026
          %v2028 = vpop.f32.mrf.mxu0
          %v2029 = vadd.f32 0.0, %v2028
          %2030 = vmatmul.bf16.gmra.mxu0 %v1886
          %v2031 = vpop.f32.mrf.mxu0
          %v2032 = vadd.f32 0.0, %v2031
          %v2033 = vpop.f32.mrf.mxu0
          %v2034 = vadd.f32 0.0, %v2033
          %2035 = vmatmul.bf16.gmra.mxu0 %v1888
          %v2036 = vpop.f32.mrf.mxu0
          %v2037 = vadd.f32 0.0, %v2036
          %v2038 = vpop.f32.mrf.mxu0
          %v2039 = vadd.f32 0.0, %v2038
          %2040 = vmatmul.bf16.gmra.mxu0 %v1890
          %v2041 = vpop.f32.mrf.mxu0
          %v2042 = vadd.f32 0.0, %v2041
          %v2043 = vpop.f32.mrf.mxu0
          %v2044 = vadd.f32 0.0, %v2043
          %2045 = vmatmul.bf16.gmra.mxu0 %v1892
          %v2046 = vpop.f32.mrf.mxu0
          %v2047 = vadd.f32 0.0, %v2046
          %v2048 = vpop.f32.mrf.mxu0
          %v2049 = vadd.f32 0.0, %v2048
          %2050 = vmatmul.bf16.gmra.mxu0 %v1894
          %v2051 = vpop.f32.mrf.mxu0
          %v2052 = vadd.f32 0.0, %v2051
          %v2053 = vpop.f32.mrf.mxu0
          %v2054 = vadd.f32 0.0, %v2053
          %2055 = vmatmul.bf16.gmra.mxu0 %v1896
          %v2056 = vpop.f32.mrf.mxu0
          %v2057 = vadd.f32 0.0, %v2056
          %v2058 = vpop.f32.mrf.mxu0
          %v2059 = vadd.f32 0.0, %v2058
          %2060 = vdwg.mxu0
          %2061 = vmatpush.bf16.msra.mxu0 %v1769
          %2062 = vmatpush.bf16.msra.mxu0 %v1768
          %2063 = vmatpush.bf16.msra.mxu0 %v1767
          %2064 = vmatpush.bf16.msra.mxu0 %v1766
          %2065 = vmatpush.bf16.msra.mxu0 %v1765
          %2066 = vmatpush.bf16.msra.mxu0 %v1764
          %2067 = vmatpush.bf16.msra.mxu0 %v1763
          %2068 = vmatpush.bf16.msra.mxu0 %v1762
          %2069 = vmatmul.bf16.gmra.mxu0 %v1883
          %v2070 = vpop.f32.mrf.mxu0
          %v2071 = vadd.f32 %v2022, %v2070
          %v2072 = vpop.f32.mrf.mxu0
          %v2073 = vadd.f32 %v2024, %v2072
          %2074 = vmatmul.bf16.gmra.mxu0 %v1885
          %v2075 = vpop.f32.mrf.mxu0
          %v2076 = vadd.f32 %v2027, %v2075
          %v2077 = vpop.f32.mrf.mxu0
          %v2078 = vadd.f32 %v2029, %v2077
          %2079 = vmatmul.bf16.gmra.mxu0 %v1887
          %v2080 = vpop.f32.mrf.mxu0
          %v2081 = vadd.f32 %v2032, %v2080
          %v2082 = vpop.f32.mrf.mxu0
          %v2083 = vadd.f32 %v2034, %v2082
          %2084 = vmatmul.bf16.gmra.mxu0 %v1889
          %v2085 = vpop.f32.mrf.mxu0
          %v2086 = vadd.f32 %v2037, %v2085
          %v2087 = vpop.f32.mrf.mxu0
          %v2088 = vadd.f32 %v2039, %v2087
          %2089 = vmatmul.bf16.gmra.mxu0 %v1891
          %v2090 = vpop.f32.mrf.mxu0
          %v2091 = vadd.f32 %v2042, %v2090
          %v2092 = vpop.f32.mrf.mxu0
          %v2093 = vadd.f32 %v2044, %v2092
          %2094 = vmatmul.bf16.gmra.mxu0 %v1893
          %v2095 = vpop.f32.mrf.mxu0
          %v2096 = vadd.f32 %v2047, %v2095
          %v2097 = vpop.f32.mrf.mxu0
          %v2098 = vadd.f32 %v2049, %v2097
          %2099 = vmatmul.bf16.gmra.mxu0 %v1895
          %v2100 = vpop.f32.mrf.mxu0
          %v2101 = vadd.f32 %v2052, %v2100
          %v2102 = vpop.f32.mrf.mxu0
          %v2103 = vadd.f32 %v2054, %v2102
          %2104 = vmatmul.bf16.gmra.mxu0 %v1897
          %v2105 = vpop.f32.mrf.mxu0
          %v2106 = vadd.f32 %v2057, %v2105
          %v2107 = vpop.f32.mrf.mxu0
          %v2108 = vadd.f32 %v2059, %v2107
          %2109 = vdwg.mxu0
          %v2110 = vadd.f32 %v1786, %v1973
          %v2111 = vadd.f32 %v1787, %v2071
          %v2112 = vadd.f32 %v1788, %v1975
          %v2113 = vadd.f32 %v1789, %v2073
          %v2114 = vadd.f32 %v1790, %v1978
          %v2115 = vadd.f32 %v1791, %v2076
          %v2116 = vadd.f32 %v1792, %v1980
          %v2117 = vadd.f32 %v1793, %v2078
          %v2118 = vadd.f32 %v1794, %v1983
          %v2119 = vadd.f32 %v1795, %v2081
          %v2120 = vadd.f32 %v1796, %v1985
          %v2121 = vadd.f32 %v1797, %v2083
          %v2122 = vadd.f32 %v1798, %v1988
          %v2123 = vadd.f32 %v1799, %v2086
          %v2124 = vadd.f32 %v1800, %v1990
          %v2125 = vadd.f32 %v1801, %v2088
          %v2126 = vadd.f32 %v1802, %v1993
          %v2127 = vadd.f32 %v1803, %v2091
          %v2128 = vadd.f32 %v1804, %v1995
          %v2129 = vadd.f32 %v1805, %v2093
          %v2130 = vadd.f32 %v1806, %v1998
          %v2131 = vadd.f32 %v1807, %v2096
          %v2132 = vadd.f32 %v1808, %v2000
          %v2133 = vadd.f32 %v1809, %v2098
          %v2134 = vadd.f32 %v1810, %v2003
          %v2135 = vadd.f32 %v1811, %v2101
          %v2136 = vadd.f32 %v1812, %v2005
          %v2137 = vadd.f32 %v1813, %v2103
          %v2138 = vadd.f32 %v1814, %v2008
          %v2139 = vadd.f32 %v1815, %v2106
          %v2140 = vadd.f32 %v1816, %v2010
          %v2141 = vadd.f32 %v1817, %v2108
          %2142 = vst [vmem:[%s353] sm:$0xff] %v2110
          %2143 = vst [vmem:[%s353 + $0x8] sm:$0xff] %v2111
          %2144 = vst [vmem:[%s353 + $0x10] sm:$0xff] %v2112
          %2145 = vst [vmem:[%s353 + $0x18] sm:$0xff] %v2113
          %2146 = vst [vmem:[%s353 + $0x20] sm:$0xff] %v2114
          %2147 = vst [vmem:[%s353 + $0x28] sm:$0xff] %v2115
          %2148 = vst [vmem:[%s353 + $0x30] sm:$0xff] %v2116
          %2149 = vst [vmem:[%s353 + $0x38] sm:$0xff] %v2117
          %2150 = vst [vmem:[%s353 + $0x40] sm:$0xff] %v2118
          %2151 = vst [vmem:[%s353 + $0x48] sm:$0xff] %v2119
          %2152 = vst [vmem:[%s353 + $0x50] sm:$0xff] %v2120
          %2153 = vst [vmem:[%s353 + $0x58] sm:$0xff] %v2121
          %2154 = vst [vmem:[%s353 + $0x60] sm:$0xff] %v2122
          %2155 = vst [vmem:[%s353 + $0x68] sm:$0xff] %v2123
          %2156 = vst [vmem:[%s353 + $0x70] sm:$0xff] %v2124
          %2157 = vst [vmem:[%s353 + $0x78] sm:$0xff] %v2125
          %2158 = vst [vmem:[%s353 + $0x80] sm:$0xff] %v2126
          %2159 = vst [vmem:[%s353 + $0x88] sm:$0xff] %v2127
          %2160 = vst [vmem:[%s353 + $0x90] sm:$0xff] %v2128
          %2161 = vst [vmem:[%s353 + $0x98] sm:$0xff] %v2129
          %2162 = vst [vmem:[%s353 + $0xa0] sm:$0xff] %v2130
          %2163 = vst [vmem:[%s353 + $0xa8] sm:$0xff] %v2131
          %2164 = vst [vmem:[%s353 + $0xb0] sm:$0xff] %v2132
          %2165 = vst [vmem:[%s353 + $0xb8] sm:$0xff] %v2133
          %2166 = vst [vmem:[%s353 + $0xc0] sm:$0xff] %v2134
          %2167 = vst [vmem:[%s353 + $0xc8] sm:$0xff] %v2135
          %2168 = vst [vmem:[%s353 + $0xd0] sm:$0xff] %v2136
          %2169 = vst [vmem:[%s353 + $0xd8] sm:$0xff] %v2137
          %2170 = vst [vmem:[%s353 + $0xe0] sm:$0xff] %v2138
          %2171 = vst [vmem:[%s353 + $0xe8] sm:$0xff] %v2139
          %2172 = vst [vmem:[%s353 + $0xf0] sm:$0xff] %v2140
          %2173 = vst [vmem:[%s353 + $0xf8] sm:$0xff] %v2141
        $region64: #{tpu_custom_call.1} parent=35 // pred_fallthru
          _
        %s2174 = sand.u32 %s161, 1
        %s2175 = scalar_lea.sflag [#allocation5], %s2174
        %s2176 = sand.u32 %s161, 1
        %s2177 = smul.addr %s2176, 256
        %s2178 = scalar_lea.vmem [#allocation10], %s2177
        // Predicated region
        $region65: #{tpu_custom_call.1} parent=35 // pred_check
          %p2179 = pneg %p171
        $region66: #{tpu_custom_call.1} parent=35 // pred_check_branch
          %2181 = sbr.rel (%p2179) target = $region68
        $region67: #{tpu_custom_call.1} parent=35 // pred_region
          %2183 = vsyncadd %s2175, 0
          %s2184 = smul.addr %s27, 32
          %s2185 = smul.addr %s2184, 8
          %s2186 = scalar_lea.hbm %s4, %s2185
          %s2187 = sshll.u32 %s2178, 4
          %s2188 = int_to_ptr.vmem [resolvable:$true] %s2187
          %s2189 = sshll.u32 %s2186, 4
          %s2190 = int_to_ptr.hbm [resolvable:$true] %s2189
          %2195 = dma.vmem_to_hbm [thread:$0]  %s2188, 4096, %s2190, %s2175, 256, 256, 16
        $region68: #{tpu_custom_call.1} parent=35 // pred_fallthru
          _
      $region36: #{tpu_custom_call.1} parent=5 // pred_fallthru
        _
      %p2196 = scmp.le.s32.totalorder 2, %s17
      // Predicated region
      $region69: #{tpu_custom_call.1} parent=5 // pred_check
        %p2197 = pneg %p2196
      $region70: #{tpu_custom_call.1} parent=5 // pred_check_branch
        %2199 = sbr.rel (%p2197) target = $region72
      $region71: #{tpu_custom_call.1} parent=5 // pred_region
        %s2200 = ssub.s32 %s17, 2
        // Predicated region
        $region73: #{tpu_custom_call.1} parent=71 // pred_check
          %p2201 = pneg %p177
        $region74: #{tpu_custom_call.1} parent=71 // pred_check_branch
          %2203 = sbr.rel (%p2201) target = $region76
        $region75: #{tpu_custom_call.1} parent=71 // pred_region
          %s2204 = sand.u32 %s162, 1
          %s2205 = scalar_lea.sflag [#allocation5], %s2204
          %s2206 = sand.u32 %s162, 1
          %s2207 = smul.addr %s2206, 256
          %s2208 = scalar_lea.vmem [#allocation10], %s2207
          %2210 = dma.done %s2205, 4096
        $region76: #{tpu_custom_call.1} parent=71 // pred_fallthru
          _
      $region72: #{tpu_custom_call.1} parent=5 // pred_fallthru
        _
    $region6: #{tpu_custom_call.1} parent=1 // loop_footer
      %s21 = sadd.s32 1, %s17
    $region7: #{tpu_custom_call.1} parent=1 // loop_footer_branch
      %16 = sbr.rel target = $region3
    $region8: #{tpu_custom_call.1} parent=1 // loop_exit
      _
    %2211 = vsyncpa [#allocation4], 1
    %s2212 = scalar_lea.sflag [#allocation4], 1
    %2213 = vsyncpa %s2212, 1
    %2214 = vsyncpa [#allocation7], 1
    %2215 = vsyncpa [#allocation5], 1
    %s2216 = scalar_lea.sflag [#allocation5], 1
    %2217 = vsyncpa %s2216, 1

</llo_original>
